<compile_context>
chip_gen: v7x
topology: tpu7x:2x2x1
jax: 0.10.0
libtpu: 0.0.40
codegen_flags: <defaults>
</compile_context>

<pallas_src>
import math

import jax
import jax.numpy as jnp
from jax.experimental import pallas as pl
from jax.experimental.pallas import tpu as pltpu


# ----------------------------- fused kernel --------------------------------

def _make_mha_kernel(h, d_k, tq, tk, has_mask, key_mask, return_attn, mxu_dtype):
    """One grid step = (batch b, query tile qi, kv tile kv)."""
    d_model = h * d_k

    def kernel(*refs):
        i = 0
        xq_ref = refs[i]; i += 1            # (1, tq, d_model)
        xk_ref = refs[i]; i += 1            # (1, tk, d_model)
        xv_ref = refs[i]; i += 1            # (1, tk, d_model)
        mask_ref = None
        if has_mask:
            mask_ref = refs[i]; i += 1      # key: (1,1,1,tk) ; full: (1,tq,tk) int8
        (wq_ref, bq_ref, wk_ref, bk_ref,
         wv_ref, bv_ref, wo_ref, bo_ref) = refs[i:i + 8]
        i += 8
        out_ref = refs[i]; i += 1           # (1, tq, d_model)
        p_ref = None
        if return_attn:
            p_ref = refs[i]; i += 1         # (1, h, tq, tk) with tk == S
        q_s, k_s, v_s, m_s, l_s, acc_s = refs[i:i + 6]

        qi = pl.program_id(1)
        kv = pl.program_id(2)
        last_kv = pl.num_programs(2) - 1

        def split_heads(x):                 # (t, d_model) -> (h, t, d_k)
            t = x.shape[0]
            return jnp.transpose(x.reshape(t, h, d_k), (1, 0, 2))

        # ---- per-(b, qi) init: Q projection (1/sqrt(d_k) already folded into Wq/bq).
        @pl.when(kv == 0)
        def _():
            xq = xq_ref[0].astype(mxu_dtype)
            q = jnp.dot(xq, wq_ref[...],
                        preferred_element_type=jnp.float32) + bq_ref[...]
            q_s[...] = split_heads(q).astype(q_s.dtype)
            m_s[...] = jnp.full(m_s.shape, -jnp.inf, dtype=m_s.dtype)
            l_s[...] = jnp.zeros(l_s.shape, dtype=l_s.dtype)
            acc_s[...] = jnp.zeros(acc_s.shape, dtype=acc_s.dtype)

        # ---- per-(b, kv) K/V projection: done once on the first query-tile sweep and
        #      kept resident in VMEM scratch for every later query tile of this batch.
        @pl.when(qi == 0)
        def _():
            xk = xk_ref[0].astype(mxu_dtype)
            xv = xv_ref[0].astype(mxu_dtype)
            k = jnp.dot(xk, wk_ref[...],
                        preferred_element_type=jnp.float32) + bk_ref[...]
            v = jnp.dot(xv, wv_ref[...],
                        preferred_element_type=jnp.float32) + bv_ref[...]
            k_s[kv] = split_heads(k).astype(k_s.dtype)
            v_s[kv] = split_heads(v).astype(v_s.dtype)

        # ---- one (q-tile, kv-tile) attention step, all heads batched. ----
        q_h = q_s[...]                      # (h, tq, d_k), pre-scaled, mxu_dtype
        k_h = k_s[kv]                       # (h, tk, d_k)
        v_h = v_s[kv]

        s = jnp.einsum("hqd,hkd->hqk", q_h, k_h,
                       preferred_element_type=jnp.float32)       # (h, tq, tk) f32

        if has_mask:
            if key_mask:
                keep = mask_ref[0, 0] != 0          # (1, tk): broadcast over q rows
            else:
                keep = mask_ref[0] != 0             # (tq, tk)
            # torch masked_fill value for f32 scores
            s = jnp.where(keep[None], s, -1000000000.0)

        # online softmax (f32 math)
        m_prev = m_s[...]
        m_new = jnp.maximum(m_prev, jnp.max(s, axis=-1, keepdims=True))
        alpha = jnp.exp(m_prev - m_new)
        e = jnp.exp(s - m_new)
        l_new = alpha * l_s[...] + jnp.sum(e, axis=-1, keepdims=True)

        pv = jnp.einsum("hqk,hkd->hqd", e.astype(mxu_dtype), v_h,
                        preferred_element_type=jnp.float32)      # (h, tq, d_k)
        acc_s[...] = alpha * acc_s[...] + pv
        m_s[...] = m_new
        l_s[...] = l_new

        if return_attn:
            # Single KV tile enforced by the wrapper, so l_new is the final denominator.
            p = e * pl.reciprocal(l_new, approx=True)
            p_ref[0] = p.astype(p_ref.dtype)

        # ---- finalize at the last KV tile: normalize, merge heads, output projection.
        @pl.when(kv == last_kv)
        def _():
            ctx = acc_s[...] * pl.reciprocal(l_s[...], approx=True)   # (h, tq, d_k) f32
            ctx = jnp.transpose(ctx, (1, 0, 2)).reshape(tq, d_model)  # lane-dense merge
            out = jnp.dot(ctx.astype(mxu_dtype), wo_ref[...],
                          preferred_element_type=jnp.float32) + bo_ref[...]
            out_ref[0] = out.astype(out_ref.dtype)

    return kernel


# ----------------------------- wrapper --------------------------------------

def init_mha_params(key, h, d_model):
    """Deterministic init matching torch.nn.Linear shapes (4 linears, stored as W^T)."""
    params = []
    bound = 1.0 / math.sqrt(d_model)
    for _ in range(4):
        kw, kb, key = jax.random.split(key, 3)
        w = jax.random.uniform(kw, (d_model, d_model), jnp.float32, -bound, bound)
        b = jax.random.uniform(kb, (1, d_model), jnp.float32, -bound, bound)
        params.append((w, b))
    return params


def multi_head_attention(params, h, query, key, value, mask=None,
                         return_attn=False, mxu_dtype=jnp.float32,
                         q_tile=None, kv_tile=None):
    """Fused MultiHeadAttention forward.

    query/key/value: (B, S, d_model) f32.
    mask: None, (B, S) / (B, 1, S) key-padding mask, or (B, S, S) full mask (1 = keep).
    Returns out (B, S, d_model); plus p_attn (B, h, S, S) if return_attn.
    """
    B, S, d_model = query.shape
    assert d_model % h == 0
    d_k = d_model // h

    # --- tile selection (flash-style; defaults keep VMEM bounded at large S) ---
    if q_tile is None:
        q_tile = 128 if S % 128 == 0 else S
    if kv_tile is None:
        kv_tile = 128 if S % 128 == 0 else S
    if return_attn:
        kv_tile = S            # online softmax cannot emit final p_attn per KV tile
    assert S % q_tile == 0 and S % kv_tile == 0
    n_q, n_kv = S // q_tile, S // kv_tile

    # --- mask plumbing: never materialize a (B, S, S) broadcast for a key mask ---
    has_mask = mask is not None
    key_mask = False
    mask_in = None
    mask_spec = None
    if has_mask:
        m = mask
        if m.ndim == 2:                            # (B, S) key-padding mask
            m = m[:, None, :]
        if m.shape[1] == 1:                        # (B, 1, S): broadcast over queries/heads
            key_mask = True
            mask_in = m.astype(jnp.int8).reshape(B, n_kv, 1, kv_tile)
            mask_spec = pl.BlockSpec((1, 1, 1, kv_tile),
                                     lambda b, qi, kv: (b, kv, 0, 0))
        else:                                      # (B, S, S): full mask, block-tiled
            mask_in = m.astype(jnp.int8)
            mask_spec = pl.BlockSpec((1, q_tile, kv_tile),
                                     lambda b, qi, kv: (b, qi, kv))

    # --- weights: fold 1/sqrt(d_k) into Wq/bq; pre-cast MXU operands once ---
    scale = 1.0 / math.sqrt(d_k)
    (wq, bq), (wk, bk), (wv, bv), (wo, bo) = params
    weights = [((wq * scale).astype(mxu_dtype), (bq * scale).astype(jnp.float32)),
               (wk.astype(mxu_dtype), bk.astype(jnp.float32)),
               (wv.astype(mxu_dtype), bv.astype(jnp.float32)),
               (wo.astype(mxu_dtype), bo.astype(jnp.float32))]

    # xk/xv blocks are only consumed during the qi == 0 sweep (K/V projections are
    # cached in VMEM scratch); the conditional index keeps them from being re-streamed
    # from HBM on every later query tile.
    def kv_index(b, qi, kv):
        return (b, jnp.where(qi == 0, kv, 0), 0)

    inputs = [query, key, value]
    in_specs = [pl.BlockSpec((1, q_tile, d_model), lambda b, qi, kv: (b, qi, 0)),
                pl.BlockSpec((1, kv_tile, d_model), kv_index),
                pl.BlockSpec((1, kv_tile, d_model), kv_index)]
    if has_mask:
        inputs.append(mask_in)
        in_specs.append(mask_spec)
    for (w, bia) in weights:
        inputs.extend((w, bia))
        # constant index_map -> DMAed once, resident in VMEM for the whole grid
        in_specs.append(pl.BlockSpec((d_model, d_model), lambda b, qi, kv: (0, 0)))
        in_specs.append(pl.BlockSpec((1, d_model), lambda b, qi, kv: (0, 0)))

    out_spec = pl.BlockSpec((1, q_tile, d_model), lambda b, qi, kv: (b, qi, 0))
    out_shape = jax.ShapeDtypeStruct((B, S, d_model), query.dtype)
    if return_attn:
        out_specs = (out_spec,
                     pl.BlockSpec((1, h, q_tile, S), lambda b, qi, kv: (b, 0, qi, 0)))
        out_shapes = (out_shape, jax.ShapeDtypeStruct((B, h, S, S), jnp.float32))
    else:
        out_specs = out_spec
        out_shapes = out_shape

    scratch_shapes = [
        pltpu.VMEM((h, q_tile, d_k), mxu_dtype),          # Q (heads-as-batch, scaled)
        pltpu.VMEM((n_kv, h, kv_tile, d_k), mxu_dtype),   # K, resident across q tiles
        pltpu.VMEM((n_kv, h, kv_tile, d_k), mxu_dtype),   # V
        pltpu.VMEM((h, q_tile, 1), jnp.float32),          # running max
        pltpu.VMEM((h, q_tile, 1), jnp.float32),          # running denom
        pltpu.VMEM((h, q_tile, d_k), jnp.float32),        # output accumulator
    ]

    kernel = _make_mha_kernel(h, d_k, q_tile, kv_tile, has_mask, key_mask,
                              return_attn, mxu_dtype)

    itemsize = jnp.dtype(query.dtype).itemsize
    w_itemsize = jnp.dtype(mxu_dtype).itemsize
    cost = pl.CostEstimate(
        flops=8 * B * S * d_model * d_model + 4 * B * S * S * d_model,
        transcendentals=B * h * S * S,
        bytes_accessed=(4 * B * S * d_model * itemsize
                        + 4 * d_model * (d_model + 1) * w_itemsize
                        + (B * S if has_mask else 0)))

    result = pl.pallas_call(
        kernel,
        out_shape=out_shapes,
        grid=(B, n_q, n_kv),
        in_specs=in_specs,
        out_specs=out_specs,
        scratch_shapes=scratch_shapes,
        compiler_params=pltpu.CompilerParams(
            # batch shards across TensorCores; the query axis must stay sequential so
            # the qi==0 sweep that fills the K/V scratch runs before the tiles that
            # reuse it; the kv axis is the online-softmax reduction.
            dimension_semantics=("parallel", "arbitrary", "arbitrary"),
            vmem_limit_bytes=64 * 1024 * 1024),
        cost_estimate=cost,
    )(*inputs)

    if return_attn:
        return result[0], result[1]
    return result


# ----------------------------- reference (plain JAX) ------------------------

def reference_mha(params, h, query, key, value, mask=None):
    B, S, d_model = query.shape
    d_k = d_model // h

    def lin(p, x):
        w, b = p
        return x @ w + b[0]

    def proj(p, x):
        return lin(p, x).reshape(B, S, h, d_k).transpose(0, 2, 1, 3)

    q, k, v = proj(params[0], query), proj(params[1], key), proj(params[2], value)
    scores = jnp.einsum("bhqd,bhkd->bhqk", q, k) / math.sqrt(d_k)
    if mask is not None:
        m = mask if mask.ndim == 3 else mask[:, None, :]
        scores = jnp.where(m[:, None, :, :] == 0, -1e9, scores)
    p = jax.nn.softmax(scores, axis=-1)
    x = jnp.einsum("bhqk,bhkd->bhqd", p, v)
    x = x.transpose(0, 2, 1, 3).reshape(B, S, d_model)
    return lin(params[3], x), p


# ----------------------------- main ------------------------------------------

if __name__ == "__main__":
    B, S, d_model, h = 2, 16, 32, 4   # small, but big enough to exercise the tiling

    root = jax.random.PRNGKey(0)
    kq, kk, kval, kp = jax.random.split(root, 4)
    query = jax.random.normal(kq, (B, S, d_model), jnp.float32)
    key_in = jax.random.normal(kk, (B, S, d_model), jnp.float32)
    value = jax.random.normal(kval, (B, S, d_model), jnp.float32)
    params = init_mha_params(kp, h, d_model)

    # key-padding mask (1 = keep): mask out the last 3 key positions
    pad_mask = jnp.ones((B, S), jnp.int32).at[:, -3:].set(0)

    # 1) tiled flash path (2 query tiles x 2 KV tiles), key-padding mask
    out = jax.block_until_ready(
        multi_head_attention(params, h, query, key_in, value, pad_mask,
                             q_tile=8, kv_tile=8))
    ref_out, ref_p = reference_mha(params, h, query, key_in, value, pad_mask)
    assert out.shape == (B, S, d_model)
    assert jnp.allclose(out, ref_out, atol=5e-3, rtol=5e-3), "tiled masked out mismatch"

    # 2) p_attn path (single KV tile required), still query-tiled
    out2, p_attn = multi_head_attention(params, h, query, key_in, value, pad_mask,
                                        return_attn=True, q_tile=8)
    jax.block_until_ready((out2, p_attn))
    assert p_attn.shape == (B, h, S, S)
    assert jnp.allclose(out2, ref_out, atol=5e-3, rtol=5e-3), "p_attn-path out mismatch"
    assert jnp.allclose(p_attn, ref_p, atol=5e-3, rtol=5e-3), "p_attn mismatch"

    # 3) no-mask tiled path
    out3 = jax.block_until_ready(
        multi_head_attention(params, h, query, key_in, value, mask=None,
                             q_tile=8, kv_tile=8))
    ref3, _ = reference_mha(params, h, query, key_in, value, None)
    assert jnp.allclose(out3, ref3, atol=5e-3, rtol=5e-3), "no-mask mismatch"

    # 4) full (B, S, S) mask path (causal); single KV tile keeps the mask block legal
    causal = jnp.broadcast_to(jnp.tril(jnp.ones((S, S), jnp.int32)), (B, S, S))
    out4 = jax.block_until_ready(
        multi_head_attention(params, h, query, key_in, value, causal,
                             q_tile=8, kv_tile=S))
    ref4, _ = reference_mha(params, h, query, key_in, value, causal)
    assert jnp.allclose(out4, ref4, atol=5e-3, rtol=5e-3), "full-mask mismatch"

    # 5) bf16 MXU-operand path (f32 softmax/accumulation), looser tolerance
    out5 = jax.block_until_ready(
        multi_head_attention(params, h, query, key_in, value, pad_mask,
                             q_tile=8, kv_tile=8, mxu_dtype=jnp.bfloat16))
    assert jnp.allclose(out5, ref_out, atol=1e-1, rtol=1e-1), "bf16 mismatch"

    print("KERNEL_OK")
</pallas_src>

<mosaic_0001>
module attributes {stable_mosaic.version = 11 : i64} {
  func.func @kernel(%arg0: i32, %arg1: i32, %arg2: i32, %arg3: memref<1x8x32xf32, #tpu.memory_space<vmem>>, %arg4: memref<1x8x32xf32, #tpu.memory_space<vmem>>, %arg5: memref<1x8x32xf32, #tpu.memory_space<vmem>>, %arg6: memref<1x1x1x8xi8, #tpu.memory_space<vmem>>, %arg7: memref<32x32xf32, #tpu.memory_space<vmem>>, %arg8: memref<1x32xf32, #tpu.memory_space<vmem>>, %arg9: memref<32x32xf32, #tpu.memory_space<vmem>>, %arg10: memref<1x32xf32, #tpu.memory_space<vmem>>, %arg11: memref<32x32xf32, #tpu.memory_space<vmem>>, %arg12: memref<1x32xf32, #tpu.memory_space<vmem>>, %arg13: memref<32x32xf32, #tpu.memory_space<vmem>>, %arg14: memref<1x32xf32, #tpu.memory_space<vmem>>, %arg15: memref<1x8x32xf32, #tpu.memory_space<vmem>>, %arg16: memref<4x8x8xf32, #tpu.memory_space<vmem>>, %arg17: memref<2x4x8x8xf32, #tpu.memory_space<vmem>>, %arg18: memref<2x4x8x8xf32, #tpu.memory_space<vmem>>, %arg19: memref<4x8x1xf32, #tpu.memory_space<vmem>>, %arg20: memref<4x8x1xf32, #tpu.memory_space<vmem>>, %arg21: memref<4x8x8xf32, #tpu.memory_space<vmem>>) attributes {dimension_semantics = [#tpu.dimension_semantics<parallel>, #tpu.dimension_semantics<arbitrary>, #tpu.dimension_semantics<arbitrary>], iteration_bounds = array<i64: 2, 2, 2>, scalar_prefetch = 0 : i64, scratch_operands = 6 : i64, tpu.core_type = #tpu.core_type<tc>, window_params = [{transform_indices = @transform_0, window_bounds = array<i64: 1, 8, 32>}, {transform_indices = @transform_1, window_bounds = array<i64: 1, 8, 32>}, {transform_indices = @transform_2, window_bounds = array<i64: 1, 8, 32>}, {transform_indices = @transform_3, window_bounds = array<i64: 1, 1, 1, 8>}, {pipeline_mode = #tpu.pipeline_mode<synchronous>, transform_indices = @transform_4, window_bounds = array<i64: 32, 32>}, {pipeline_mode = #tpu.pipeline_mode<synchronous>, transform_indices = @transform_5, window_bounds = array<i64: 1, 32>}, {pipeline_mode = #tpu.pipeline_mode<synchronous>, transform_indices = @transform_6, window_bounds = array<i64: 32, 32>}, {pipeline_mode = #tpu.pipeline_mode<synchronous>, transform_indices = @transform_7, window_bounds = array<i64: 1, 32>}, {pipeline_mode = #tpu.pipeline_mode<synchronous>, transform_indices = @transform_8, window_bounds = array<i64: 32, 32>}, {pipeline_mode = #tpu.pipeline_mode<synchronous>, transform_indices = @transform_9, window_bounds = array<i64: 1, 32>}, {pipeline_mode = #tpu.pipeline_mode<synchronous>, transform_indices = @transform_10, window_bounds = array<i64: 32, 32>}, {pipeline_mode = #tpu.pipeline_mode<synchronous>, transform_indices = @transform_11, window_bounds = array<i64: 1, 32>}, {transform_indices = @transform_12, window_bounds = array<i64: 1, 8, 32>}]} {
    %c0_i32 = arith.constant 0 : i32
    %0 = arith.cmpi eq, %arg2, %c0_i32 : i32
    %1 = arith.extui %0 : i1 to i32
    %c0_i32_0 = arith.constant 0 : i32
    %2 = arith.cmpi ne, %1, %c0_i32_0 : i32
    scf.if %2 {
      %c0_38 = arith.constant 0 : index
      %c0_39 = arith.constant 0 : index
      %c0_40 = arith.constant 0 : index
      %48 = vector.load %arg3[%c0_38, %c0_39, %c0_40] : memref<1x8x32xf32, #tpu.memory_space<vmem>>, vector<1x8x32xf32>
      %49 = vector.shape_cast %48 : vector<1x8x32xf32> to vector<8x32xf32>
      %c0_41 = arith.constant 0 : index
      %c0_42 = arith.constant 0 : index
      %50 = vector.load %arg7[%c0_41, %c0_42] : memref<32x32xf32, #tpu.memory_space<vmem>>, vector<32x32xf32>
      %cst_43 = arith.constant dense<0.000000e+00> : vector<8x32xf32>
      %51 = tpu.matmul %49, %50, %cst_43 {dimension_numbers = #tpu.dot_dimension_numbers<[1], [0], [0], [1], [0, 0, 1, 1], [], []>} : vector<8x32xf32>, vector<32x32xf32>, vector<8x32xf32> -> vector<8x32xf32>
      %c0_44 = arith.constant 0 : index
      %c0_45 = arith.constant 0 : index
      %52 = vector.load %arg8[%c0_44, %c0_45] : memref<1x32xf32, #tpu.memory_space<vmem>>, vector<1x32xf32>
      %53 = vector.broadcast %52 : vector<1x32xf32> to vector<8x32xf32>
      %54 = arith.addf %51, %53 : vector<8x32xf32>
      %55 = vector.shape_cast %54 : vector<8x32xf32> to vector<8x4x8xf32>
      %56 = tpu.transpose %55, [1, 0, 2] : vector<8x4x8xf32> -> vector<4x8x8xf32>
      %c0_46 = arith.constant 0 : index
      %c0_47 = arith.constant 0 : index
      %c0_48 = arith.constant 0 : index
      %57 = vector.load %arg16[%c0_46, %c0_47, %c0_48] : memref<4x8x8xf32, #tpu.memory_space<vmem>>, vector<4x8x8xf32>
      tpu.vector_store %arg16[%c0_46, %c0_47, %c0_48], %56 {strides = array<i32>} : memref<4x8x8xf32, #tpu.memory_space<vmem>>, vector<4x8x8xf32>,
      %cst_49 = arith.constant 0xFF800000 : f32
      %58 = vector.broadcast %cst_49 : f32 to vector<4x8x1xf32>
      %c0_50 = arith.constant 0 : index
      %c0_51 = arith.constant 0 : index
      %c0_52 = arith.constant 0 : index
      %59 = vector.load %arg19[%c0_50, %c0_51, %c0_52] : memref<4x8x1xf32, #tpu.memory_space<vmem>>, vector<4x8x1xf32>
      tpu.vector_store %arg19[%c0_50, %c0_51, %c0_52], %58 {strides = array<i32>} : memref<4x8x1xf32, #tpu.memory_space<vmem>>, vector<4x8x1xf32>,
      %cst_53 = arith.constant 0.000000e+00 : f32
      %60 = vector.broadcast %cst_53 : f32 to vector<4x8x1xf32>
      %c0_54 = arith.constant 0 : index
      %c0_55 = arith.constant 0 : index
      %c0_56 = arith.constant 0 : index
      %61 = vector.load %arg20[%c0_54, %c0_55, %c0_56] : memref<4x8x1xf32, #tpu.memory_space<vmem>>, vector<4x8x1xf32>
      tpu.vector_store %arg20[%c0_54, %c0_55, %c0_56], %60 {strides = array<i32>} : memref<4x8x1xf32, #tpu.memory_space<vmem>>, vector<4x8x1xf32>,
      %cst_57 = arith.constant 0.000000e+00 : f32
      %62 = vector.broadcast %cst_57 : f32 to vector<4x8x8xf32>
      %c0_58 = arith.constant 0 : index
      %c0_59 = arith.constant 0 : index
      %c0_60 = arith.constant 0 : index
      %63 = vector.load %arg21[%c0_58, %c0_59, %c0_60] : memref<4x8x8xf32, #tpu.memory_space<vmem>>, vector<4x8x8xf32>
      tpu.vector_store %arg21[%c0_58, %c0_59, %c0_60], %62 {strides = array<i32>} : memref<4x8x8xf32, #tpu.memory_space<vmem>>, vector<4x8x8xf32>,
    } else {
    }
    %c0_i32_1 = arith.constant 0 : i32
    %3 = arith.cmpi eq, %arg1, %c0_i32_1 : i32
    %4 = arith.extui %3 : i1 to i32
    %c0_i32_2 = arith.constant 0 : i32
    %5 = arith.cmpi ne, %4, %c0_i32_2 : i32
    scf.if %5 {
      %c0_38 = arith.constant 0 : index
      %c0_39 = arith.constant 0 : index
      %c0_40 = arith.constant 0 : index
      %48 = vector.load %arg4[%c0_38, %c0_39, %c0_40] : memref<1x8x32xf32, #tpu.memory_space<vmem>>, vector<1x8x32xf32>
      %49 = vector.shape_cast %48 : vector<1x8x32xf32> to vector<8x32xf32>
      %c0_41 = arith.constant 0 : index
      %c0_42 = arith.constant 0 : index
      %c0_43 = arith.constant 0 : index
      %50 = vector.load %arg5[%c0_41, %c0_42, %c0_43] : memref<1x8x32xf32, #tpu.memory_space<vmem>>, vector<1x8x32xf32>
      %51 = vector.shape_cast %50 : vector<1x8x32xf32> to vector<8x32xf32>
      %c0_44 = arith.constant 0 : index
      %c0_45 = arith.constant 0 : index
      %52 = vector.load %arg9[%c0_44, %c0_45] : memref<32x32xf32, #tpu.memory_space<vmem>>, vector<32x32xf32>
      %cst_46 = arith.constant dense<0.000000e+00> : vector<8x32xf32>
      %53 = tpu.matmul %49, %52, %cst_46 {dimension_numbers = #tpu.dot_dimension_numbers<[1], [0], [0], [1], [0, 0, 1, 1], [], []>} : vector<8x32xf32>, vector<32x32xf32>, vector<8x32xf32> -> vector<8x32xf32>
      %c0_47 = arith.constant 0 : index
      %c0_48 = arith.constant 0 : index
      %54 = vector.load %arg10[%c0_47, %c0_48] : memref<1x32xf32, #tpu.memory_space<vmem>>, vector<1x32xf32>
      %55 = vector.broadcast %54 : vector<1x32xf32> to vector<8x32xf32>
      %56 = arith.addf %53, %55 : vector<8x32xf32>
      %c0_49 = arith.constant 0 : index
      %c0_50 = arith.constant 0 : index
      %57 = vector.load %arg11[%c0_49, %c0_50] : memref<32x32xf32, #tpu.memory_space<vmem>>, vector<32x32xf32>
      %cst_51 = arith.constant dense<0.000000e+00> : vector<8x32xf32>
      %58 = tpu.matmul %51, %57, %cst_51 {dimension_numbers = #tpu.dot_dimension_numbers<[1], [0], [0], [1], [0, 0, 1, 1], [], []>} : vector<8x32xf32>, vector<32x32xf32>, vector<8x32xf32> -> vector<8x32xf32>
      %c0_52 = arith.constant 0 : index
      %c0_53 = arith.constant 0 : index
      %59 = vector.load %arg12[%c0_52, %c0_53] : memref<1x32xf32, #tpu.memory_space<vmem>>, vector<1x32xf32>
      %60 = vector.broadcast %59 : vector<1x32xf32> to vector<8x32xf32>
      %61 = arith.addf %58, %60 : vector<8x32xf32>
      %62 = vector.shape_cast %56 : vector<8x32xf32> to vector<8x4x8xf32>
      %63 = tpu.transpose %62, [1, 0, 2] : vector<8x4x8xf32> -> vector<4x8x8xf32>
      %64 = arith.index_cast %arg2 : i32 to index
      %c0_54 = arith.constant 0 : index
      %c0_55 = arith.constant 0 : index
      %c0_56 = arith.constant 0 : index
      %65 = vector.load %arg17[%64, %c0_54, %c0_55, %c0_56] : memref<2x4x8x8xf32, #tpu.memory_space<vmem>>, vector<1x4x8x8xf32>
      %66 = vector.shape_cast %65 : vector<1x4x8x8xf32> to vector<4x8x8xf32>
      %67 = vector.shape_cast %63 : vector<4x8x8xf32> to vector<1x4x8x8xf32>
      tpu.vector_store %arg17[%64, %c0_54, %c0_55, %c0_56], %67 {strides = array<i32>} : memref<2x4x8x8xf32, #tpu.memory_space<vmem>>, vector<1x4x8x8xf32>,
      %68 = vector.shape_cast %61 : vector<8x32xf32> to vector<8x4x8xf32>
      %69 = tpu.transpose %68, [1, 0, 2] : vector<8x4x8xf32> -> vector<4x8x8xf32>
      %70 = arith.index_cast %arg2 : i32 to index
      %c0_57 = arith.constant 0 : index
      %c0_58 = arith.constant 0 : index
      %c0_59 = arith.constant 0 : index
      %71 = vector.load %arg18[%70, %c0_57, %c0_58, %c0_59] : memref<2x4x8x8xf32, #tpu.memory_space<vmem>>, vector<1x4x8x8xf32>
      %72 = vector.shape_cast %71 : vector<1x4x8x8xf32> to vector<4x8x8xf32>
      %73 = vector.shape_cast %69 : vector<4x8x8xf32> to vector<1x4x8x8xf32>
      tpu.vector_store %arg18[%70, %c0_57, %c0_58, %c0_59], %73 {strides = array<i32>} : memref<2x4x8x8xf32, #tpu.memory_space<vmem>>, vector<1x4x8x8xf32>,
    } else {
    }
    %c0 = arith.constant 0 : index
    %c0_3 = arith.constant 0 : index
    %c0_4 = arith.constant 0 : index
    %6 = vector.load %arg16[%c0, %c0_3, %c0_4] : memref<4x8x8xf32, #tpu.memory_space<vmem>>, vector<4x8x8xf32>
    %7 = arith.index_cast %arg2 : i32 to index
    %c0_5 = arith.constant 0 : index
    %c0_6 = arith.constant 0 : index
    %c0_7 = arith.constant 0 : index
    %8 = vector.load %arg17[%7, %c0_5, %c0_6, %c0_7] : memref<2x4x8x8xf32, #tpu.memory_space<vmem>>, vector<1x4x8x8xf32>
    %9 = vector.shape_cast %8 : vector<1x4x8x8xf32> to vector<4x8x8xf32>
    %10 = arith.index_cast %arg2 : i32 to index
    %c0_8 = arith.constant 0 : index
    %c0_9 = arith.constant 0 : index
    %c0_10 = arith.constant 0 : index
    %11 = vector.load %arg18[%10, %c0_8, %c0_9, %c0_10] : memref<2x4x8x8xf32, #tpu.memory_space<vmem>>, vector<1x4x8x8xf32>
    %12 = vector.shape_cast %11 : vector<1x4x8x8xf32> to vector<4x8x8xf32>
    "tpu.trace_start"() <{level = 10 : i32, message = "hqd,hkd->hqk"}> : () -> ()
    %cst = arith.constant dense<0.000000e+00> : vector<4x8x8xf32>
    %13 = tpu.matmul %6, %9, %cst {dimension_numbers = #tpu.dot_dimension_numbers<[2], [2], [1], [1], [0, 0, 0, 1, 1, 1], [0], [0]>} : vector<4x8x8xf32>, vector<4x8x8xf32>, vector<4x8x8xf32> -> vector<4x8x8xf32>
    "tpu.trace_stop"() : () -> ()
    %c0_11 = arith.constant 0 : index
    %c0_12 = arith.constant 0 : index
    %c0_13 = arith.constant 0 : index
    %c0_14 = arith.constant 0 : index
    %14 = vector.load %arg6[%c0_11, %c0_12, %c0_13, %c0_14] : memref<1x1x1x8xi8, #tpu.memory_space<vmem>>, vector<1x1x1x8xi8>
    %15 = vector.shape_cast %14 : vector<1x1x1x8xi8> to vector<1x8xi8>
    %c0_i8 = arith.constant 0 : i8
    %16 = vector.broadcast %c0_i8 : i8 to vector<1x8xi8>
    %17 = arith.cmpi ne, %15, %16 : vector<1x8xi8>
    %18 = vector.shape_cast %17 : vector<1x8xi1> to vector<1x1x8xi1>
    %cst_15 = arith.constant -1.000000e+09 : f32
    %19 = vector.shape_cast %18 : vector<1x1x8xi1> to vector<1x1x8xi1>
    %20 = vector.broadcast %19 : vector<1x1x8xi1> to vector<4x8x8xi1>
    %21 = vector.broadcast %cst_15 : f32 to vector<4x8x8xf32>
    %22 = arith.select %20, %13, %21 : vector<4x8x8xi1>, vector<4x8x8xf32>
    %c0_16 = arith.constant 0 : index
    %c0_17 = arith.constant 0 : index
    %c0_18 = arith.constant 0 : index
    %23 = vector.load %arg19[%c0_16, %c0_17, %c0_18] : memref<4x8x1xf32, #tpu.memory_space<vmem>>, vector<4x8x1xf32>
    %cst_19 = arith.constant dense<0xFF800000> : vector<4x8xf32>
    %24 = vector.multi_reduction <maximumf>, %22, %cst_19 [2] : vector<4x8x8xf32> to vector<4x8xf32>
    %25 = vector.shape_cast %24 : vector<4x8xf32> to vector<4x8x1xf32>
    %26 = arith.maximumf %23, %25 : vector<4x8x1xf32>
    %27 = arith.subf %23, %26 : vector<4x8x1xf32>
    %28 = math.exp %27 : vector<4x8x1xf32>
    %29 = vector.broadcast %26 : vector<4x8x1xf32> to vector<4x8x8xf32>
    %30 = arith.subf %22, %29 : vector<4x8x8xf32>
    %31 = math.exp %30 : vector<4x8x8xf32>
    %c0_20 = arith.constant 0 : index
    %c0_21 = arith.constant 0 : index
    %c0_22 = arith.constant 0 : index
    %32 = vector.load %arg20[%c0_20, %c0_21, %c0_22] : memref<4x8x1xf32, #tpu.memory_space<vmem>>, vector<4x8x1xf32>
    %33 = arith.mulf %28, %32 : vector<4x8x1xf32>
    %cst_23 = arith.constant dense<0.000000e+00> : vector<4x8xf32>
    %34 = vector.multi_reduction <add>, %31, %cst_23 [2] : vector<4x8x8xf32> to vector<4x8xf32>
    %35 = vector.shape_cast %34 : vector<4x8xf32> to vector<4x8x1xf32>
    %36 = arith.addf %33, %35 : vector<4x8x1xf32>
    "tpu.trace_start"() <{level = 10 : i32, message = "hqk,hkd->hqd"}> : () -> ()
    %cst_24 = arith.constant dense<0.000000e+00> : vector<4x8x8xf32>
    %37 = tpu.matmul %31, %12, %cst_24 {dimension_numbers = #tpu.dot_dimension_numbers<[2], [1], [1], [2], [0, 0, 0, 1, 1, 2], [0], [0]>} : vector<4x8x8xf32>, vector<4x8x8xf32>, vector<4x8x8xf32> -> vector<4x8x8xf32>
    "tpu.trace_stop"() : () -> ()
    %c0_25 = arith.constant 0 : index
    %c0_26 = arith.constant 0 : index
    %c0_27 = arith.constant 0 : index
    %38 = vector.load %arg21[%c0_25, %c0_26, %c0_27] : memref<4x8x8xf32, #tpu.memory_space<vmem>>, vector<4x8x8xf32>
    %39 = vector.broadcast %28 : vector<4x8x1xf32> to vector<4x8x8xf32>
    %40 = arith.mulf %39, %38 : vector<4x8x8xf32>
    %41 = arith.addf %40, %37 : vector<4x8x8xf32>
    %c0_28 = arith.constant 0 : index
    %c0_29 = arith.constant 0 : index
    %c0_30 = arith.constant 0 : index
    %42 = vector.load %arg21[%c0_28, %c0_29, %c0_30] : memref<4x8x8xf32, #tpu.memory_space<vmem>>, vector<4x8x8xf32>
    tpu.vector_store %arg21[%c0_28, %c0_29, %c0_30], %41 {strides = array<i32>} : memref<4x8x8xf32, #tpu.memory_space<vmem>>, vector<4x8x8xf32>,
    %c0_31 = arith.constant 0 : index
    %c0_32 = arith.constant 0 : index
    %c0_33 = arith.constant 0 : index
    %43 = vector.load %arg19[%c0_31, %c0_32, %c0_33] : memref<4x8x1xf32, #tpu.memory_space<vmem>>, vector<4x8x1xf32>
    tpu.vector_store %arg19[%c0_31, %c0_32, %c0_33], %26 {strides = array<i32>} : memref<4x8x1xf32, #tpu.memory_space<vmem>>, vector<4x8x1xf32>,
    %c0_34 = arith.constant 0 : index
    %c0_35 = arith.constant 0 : index
    %c0_36 = arith.constant 0 : index
    %44 = vector.load %arg20[%c0_34, %c0_35, %c0_36] : memref<4x8x1xf32, #tpu.memory_space<vmem>>, vector<4x8x1xf32>
    tpu.vector_store %arg20[%c0_34, %c0_35, %c0_36], %36 {strides = array<i32>} : memref<4x8x1xf32, #tpu.memory_space<vmem>>, vector<4x8x1xf32>,
    %c1_i32 = arith.constant 1 : i32
    %45 = arith.cmpi eq, %arg2, %c1_i32 : i32
    %46 = arith.extui %45 : i1 to i32
    %c0_i32_37 = arith.constant 0 : i32
    %47 = arith.cmpi ne, %46, %c0_i32_37 : i32
    scf.if %47 {
      %c0_38 = arith.constant 0 : index
      %c0_39 = arith.constant 0 : index
      %c0_40 = arith.constant 0 : index
      %48 = vector.load %arg21[%c0_38, %c0_39, %c0_40] : memref<4x8x8xf32, #tpu.memory_space<vmem>>, vector<4x8x8xf32>
      %c0_41 = arith.constant 0 : index
      %c0_42 = arith.constant 0 : index
      %c0_43 = arith.constant 0 : index
      %49 = vector.load %arg20[%c0_41, %c0_42, %c0_43] : memref<4x8x1xf32, #tpu.memory_space<vmem>>, vector<4x8x1xf32>
      %50 = tpu.reciprocal %49 {approx = true} : vector<4x8x1xf32> -> vector<4x8x1xf32>
      %51 = vector.broadcast %50 : vector<4x8x1xf32> to vector<4x8x8xf32>
      %52 = arith.mulf %48, %51 : vector<4x8x8xf32>
      %53 = tpu.transpose %52, [1, 0, 2] : vector<4x8x8xf32> -> vector<8x4x8xf32>
      %54 = vector.shape_cast %53 : vector<8x4x8xf32> to vector<8x32xf32>
      %c0_44 = arith.constant 0 : index
      %c0_45 = arith.constant 0 : index
      %55 = vector.load %arg13[%c0_44, %c0_45] : memref<32x32xf32, #tpu.memory_space<vmem>>, vector<32x32xf32>
      %cst_46 = arith.constant dense<0.000000e+00> : vector<8x32xf32>
      %56 = tpu.matmul %54, %55, %cst_46 {dimension_numbers = #tpu.dot_dimension_numbers<[1], [0], [0], [1], [0, 0, 1, 1], [], []>} : vector<8x32xf32>, vector<32x32xf32>, vector<8x32xf32> -> vector<8x32xf32>
      %c0_47 = arith.constant 0 : index
      %c0_48 = arith.constant 0 : index
      %57 = vector.load %arg14[%c0_47, %c0_48] : memref<1x32xf32, #tpu.memory_space<vmem>>, vector<1x32xf32>
      %58 = vector.broadcast %57 : vector<1x32xf32> to vector<8x32xf32>
      %59 = arith.addf %56, %58 : vector<8x32xf32>
      %c0_49 = arith.constant 0 : index
      %c0_50 = arith.constant 0 : index
      %c0_51 = arith.constant 0 : index
      %60 = vector.load %arg15[%c0_49, %c0_50, %c0_51] : memref<1x8x32xf32, #tpu.memory_space<vmem>>, vector<1x8x32xf32>
      %61 = vector.shape_cast %60 : vector<1x8x32xf32> to vector<8x32xf32>
      %62 = vector.shape_cast %59 : vector<8x32xf32> to vector<1x8x32xf32>
      tpu.vector_store %arg15[%c0_49, %c0_50, %c0_51], %62 {strides = array<i32>} : memref<1x8x32xf32, #tpu.memory_space<vmem>>, vector<1x8x32xf32>,
    } else {
    }
    return
  }
  func.func @transform_0(%arg0: i32, %arg1: i32, %arg2: i32) -> (i32, i32, i32) {
    %c0_i32 = arith.constant 0 : i32
    %c0_i32_0 = arith.constant 0 : i32
    return %arg0, %arg1, %c0_i32 : i32, i32, i32
  }
  func.func @transform_1(%arg0: i32, %arg1: i32, %arg2: i32) -> (i32, i32, i32) {
    %c0_i32 = arith.constant 0 : i32
    %0 = arith.cmpi eq, %arg1, %c0_i32 : i32
    %c0_i32_0 = arith.constant 0 : i32
    %1 = arith.select %0, %arg2, %c0_i32_0 : i32
    %c0_i32_1 = arith.constant 0 : i32
    %c0_i32_2 = arith.constant 0 : i32
    return %arg0, %1, %c0_i32_1 : i32, i32, i32
  }
  func.func @transform_2(%arg0: i32, %arg1: i32, %arg2: i32) -> (i32, i32, i32) {
    %c0_i32 = arith.constant 0 : i32
    %0 = arith.cmpi eq, %arg1, %c0_i32 : i32
    %c0_i32_0 = arith.constant 0 : i32
    %1 = arith.select %0, %arg2, %c0_i32_0 : i32
    %c0_i32_1 = arith.constant 0 : i32
    %c0_i32_2 = arith.constant 0 : i32
    return %arg0, %1, %c0_i32_1 : i32, i32, i32
  }
  func.func @transform_3(%arg0: i32, %arg1: i32, %arg2: i32) -> (i32, i32, i32, i32) {
    %c0_i32 = arith.constant 0 : i32
    %c0_i32_0 = arith.constant 0 : i32
    %c0_i32_1 = arith.constant 0 : i32
    return %arg0, %arg2, %c0_i32, %c0_i32_0 : i32, i32, i32, i32
  }
  func.func @transform_4(%arg0: i32, %arg1: i32, %arg2: i32) -> (i32, i32) {
    %c0_i32 = arith.constant 0 : i32
    %c0_i32_0 = arith.constant 0 : i32
    %c0_i32_1 = arith.constant 0 : i32
    return %c0_i32, %c0_i32_0 : i32, i32
  }
  func.func @transform_5(%arg0: i32, %arg1: i32, %arg2: i32) -> (i32, i32) {
    %c0_i32 = arith.constant 0 : i32
    %c0_i32_0 = arith.constant 0 : i32
    %c0_i32_1 = arith.constant 0 : i32
    return %c0_i32, %c0_i32_0 : i32, i32
  }
  func.func @transform_6(%arg0: i32, %arg1: i32, %arg2: i32) -> (i32, i32) {
    %c0_i32 = arith.constant 0 : i32
    %c0_i32_0 = arith.constant 0 : i32
    %c0_i32_1 = arith.constant 0 : i32
    return %c0_i32, %c0_i32_0 : i32, i32
  }
  func.func @transform_7(%arg0: i32, %arg1: i32, %arg2: i32) -> (i32, i32) {
    %c0_i32 = arith.constant 0 : i32
    %c0_i32_0 = arith.constant 0 : i32
    %c0_i32_1 = arith.constant 0 : i32
    return %c0_i32, %c0_i32_0 : i32, i32
  }
  func.func @transform_8(%arg0: i32, %arg1: i32, %arg2: i32) -> (i32, i32) {
    %c0_i32 = arith.constant 0 : i32
    %c0_i32_0 = arith.constant 0 : i32
    %c0_i32_1 = arith.constant 0 : i32
    return %c0_i32, %c0_i32_0 : i32, i32
  }
  func.func @transform_9(%arg0: i32, %arg1: i32, %arg2: i32) -> (i32, i32) {
    %c0_i32 = arith.constant 0 : i32
    %c0_i32_0 = arith.constant 0 : i32
    %c0_i32_1 = arith.constant 0 : i32
    return %c0_i32, %c0_i32_0 : i32, i32
  }
  func.func @transform_10(%arg0: i32, %arg1: i32, %arg2: i32) -> (i32, i32) {
    %c0_i32 = arith.constant 0 : i32
    %c0_i32_0 = arith.constant 0 : i32
    %c0_i32_1 = arith.constant 0 : i32
    return %c0_i32, %c0_i32_0 : i32, i32
  }
  func.func @transform_11(%arg0: i32, %arg1: i32, %arg2: i32) -> (i32, i32) {
    %c0_i32 = arith.constant 0 : i32
    %c0_i32_0 = arith.constant 0 : i32
    %c0_i32_1 = arith.constant 0 : i32
    return %c0_i32, %c0_i32_0 : i32, i32
  }
  func.func @transform_12(%arg0: i32, %arg1: i32, %arg2: i32) -> (i32, i32, i32) {
    %c0_i32 = arith.constant 0 : i32
    %c0_i32_0 = arith.constant 0 : i32
    return %arg0, %arg1, %c0_i32 : i32, i32, i32
  }
}

</mosaic_0001>

<llo_original>
// kernel: tpu_custom_call.1
$region0: #{tpu_custom_call.1}
  #allocation0 [shape = 'u32[]', space=smem, size = 0x4, offset = 0x4, fixed_abs, tag = 'smem constant byte address 0x4 - core index']
  #allocation1 [shape = 'u32[144,128]{1,0:T(1,128)}', space=vmem, size = 0x12000, scoped, tag = 'internal scratch']
  #allocation2 [shape = 'f32[4,8,8]{2,1,0:T(8,128)}', space=vmem, size = 0x4000, scoped, tag = 'scratch operand']
  #allocation3 [shape = 'f32[2,4,8,8]{3,2,1,0:T(8,128)}', space=vmem, size = 0x8000, scoped, tag = 'scratch operand']
  #allocation4 [shape = 'f32[2,4,8,8]{3,2,1,0:T(8,128)}', space=vmem, size = 0x8000, scoped, tag = 'scratch operand']
  #allocation5 [shape = 'f32[4,8,1]{2,1,0:T(8,128)}', space=vmem, size = 0x4000, scoped, tag = 'scratch operand']
  #allocation6 [shape = 'f32[4,8,1]{2,1,0:T(8,128)}', space=vmem, size = 0x4000, scoped, tag = 'scratch operand']
  #allocation7 [shape = 'f32[4,8,8]{2,1,0:T(8,128)}', space=vmem, size = 0x4000, scoped, tag = 'scratch operand']
  %s0 = inlined_call_operand.hbm [shape: f32[2,16,32], index: 0, kind: input, shape index: {}]
  %s1 = inlined_call_operand.hbm [shape: f32[2,16,32], index: 1, kind: input, shape index: {}]
  %s2 = inlined_call_operand.hbm [shape: f32[2,16,32], index: 2, kind: input, shape index: {}]
  %s3 = inlined_call_operand.hbm [shape: s8[2,2,1,8], index: 3, kind: input, shape index: {}]
  %s4 = inlined_call_operand.hbm [shape: f32[32,32], index: 4, kind: input, shape index: {}]
  %s5 = inlined_call_operand.hbm [shape: f32[1,32], index: 5, kind: input, shape index: {}]
  %s6 = inlined_call_operand.hbm [shape: f32[32,32], index: 6, kind: input, shape index: {}]
  %s7 = inlined_call_operand.hbm [shape: f32[1,32], index: 7, kind: input, shape index: {}]
  %s8 = inlined_call_operand.hbm [shape: f32[32,32], index: 8, kind: input, shape index: {}]
  %s9 = inlined_call_operand.hbm [shape: f32[1,32], index: 9, kind: input, shape index: {}]
  %s10 = inlined_call_operand.hbm [shape: f32[32,32], index: 10, kind: input, shape index: {}]
  %s11 = inlined_call_operand.hbm [shape: f32[1,32], index: 11, kind: input, shape index: {}]
  %s12 = inlined_call_operand.hbm [shape: f32[2,16,32], index: 12, kind: output, shape index: {}]
  %s13 = sld [smem:[#allocation0]]
  $region141: #{tpu_custom_call.1} parent=0
    _
  %s15 = ssub.s32 1, %s13
  %s16 = scalar_select 0, %s15, %s13
  $region1: #{tpu_custom_call.1} parent=0
    #allocation8 [shape = 'u8[8192]{0}', space=vmem, size = 0x2000, scoped, tag = 'input window, operand 0']
    #allocation9 [shape = 's32[2]{0}', space=sflag, size = 0x8, scoped, tag = 'scoped memory for tpu_custom_call.1']
    #allocation10 [shape = 's32[2]{0}', space=sflag, size = 0x8, scoped, tag = 'scoped memory for tpu_custom_call.1']
    #allocation11 [shape = 'u8[8192]{0}', space=vmem, size = 0x2000, scoped, tag = 'input window, operand 1']
    #allocation12 [shape = 's32[2]{0}', space=sflag, size = 0x8, scoped, tag = 'scoped memory for tpu_custom_call.1']
    #allocation13 [shape = 'u8[8192]{0}', space=vmem, size = 0x2000, scoped, tag = 'input window, operand 2']
    #allocation14 [shape = 'u8[1024]{0}', space=vmem, size = 0x400, scoped, tag = 'input window, operand 3']
    #allocation15 [shape = 's32[2]{0}', space=sflag, size = 0x8, scoped, tag = 'scoped memory for tpu_custom_call.1']
    #allocation16 [shape = 'u8[16384]{0}', space=vmem, size = 0x4000, scoped, tag = 'input window, operand 4, single buffered']
    #allocation17 [shape = 'u8[512]{0}', space=vmem, size = 0x400, scoped, tag = 'input window, operand 5, single buffered']
    #allocation18 [shape = 's32[1]{0}', space=sflag, size = 0x4, scoped, tag = 'scoped memory for tpu_custom_call.1']
    #allocation19 [shape = 'u8[16384]{0}', space=vmem, size = 0x4000, scoped, tag = 'input window, operand 6, single buffered']
    #allocation20 [shape = 'u8[512]{0}', space=vmem, size = 0x400, scoped, tag = 'input window, operand 7, single buffered']
    #allocation21 [shape = 's32[1]{0}', space=sflag, size = 0x4, scoped, tag = 'scoped memory for tpu_custom_call.1']
    #allocation22 [shape = 'u8[16384]{0}', space=vmem, size = 0x4000, scoped, tag = 'input window, operand 8, single buffered']
    #allocation23 [shape = 'u8[512]{0}', space=vmem, size = 0x400, scoped, tag = 'input window, operand 9, single buffered']
    #allocation24 [shape = 's32[1]{0}', space=sflag, size = 0x4, scoped, tag = 'scoped memory for tpu_custom_call.1']
    #allocation25 [shape = 'u8[16384]{0}', space=vmem, size = 0x4000, scoped, tag = 'input window, operand 10, single buffered']
    #allocation26 [shape = 'u8[512]{0}', space=vmem, size = 0x400, scoped, tag = 'input window, operand 11, single buffered']
    #allocation27 [shape = 's32[1]{0}', space=sflag, size = 0x4, scoped, tag = 'scoped memory for tpu_custom_call.1']
    #allocation28 [shape = 'u8[8192]{0}', space=vmem, size = 0x2000, scoped, tag = 'output window, operand 0']
    %17 = vsyncpa [#allocation9], 0
    %s18 = scalar_lea.sflag [#allocation9], 1
    %19 = vsyncpa %s18, 0
    %20 = vsyncpa [#allocation12], 0
    %s21 = scalar_lea.sflag [#allocation12], 1
    %22 = vsyncpa %s21, 0
    %23 = vsyncpa [#allocation15], 0
    %s24 = scalar_lea.sflag [#allocation15], 1
    %25 = vsyncpa %s24, 0
    %26 = vsyncpa [#allocation18], 0
    %27 = vsyncpa [#allocation21], 0
    %28 = vsyncpa [#allocation24], 0
    %29 = vsyncpa [#allocation27], 0
    %30 = vsyncpa [#allocation10], 0
    %s31 = scalar_lea.sflag [#allocation10], 1
    %32 = vsyncpa %s31, 0
    loop: start=0, step=1, limit=10
    $region2: #{tpu_custom_call.1} parent=1 // loop_pre_header
      _
    $region3: #{tpu_custom_call.1} parent=1 // loop_header
      %s34 = sphi 0, %s38
      %p35 = scmp.ge.s32.totalorder %s34, 10
      %s41 = sphi 0, %s60
      %s42 = sphi 0, %s56
      %s43 = sphi 0, %s52
      %s44 = sphi 0, %s41
      %s45 = sphi 0, %s42
      %s46 = sphi 0, %s43
      %s47 = sphi 0, %s44
      %s48 = sphi 0, %s45
      %s49 = sphi 0, %s46
      %s65 = sphi 0, %s67
      %s68 = sphi 0, %s65
      %s69 = sphi 0, %s68
      %s85 = sphi 0, %s69
      %s97 = sphi 0, %s99
      %s100 = sphi 0, %s97
      %s101 = sphi 0, %s100
      %s117 = sphi 0, %s101
      %s129 = sphi 0, %s131
      %s132 = sphi 0, %s129
      %s133 = sphi 0, %s132
      %s149 = sphi 0, %s133
      %s157 = sphi 0, %s159
      %s160 = sphi 0, %s157
      %s161 = sphi 0, %s160
      %s177 = sphi 0, %s161
      %s181 = sphi 0, %s181
      %s183 = sphi 0, %s181
      %s184 = sphi 0, %s183
      %s198 = sphi 0, %s184
      %s202 = sphi 0, %s202
      %s204 = sphi 0, %s202
      %s205 = sphi 0, %s204
      %s219 = sphi 0, %s205
      %s223 = sphi 0, %s223
      %s225 = sphi 0, %s223
      %s226 = sphi 0, %s225
      %s240 = sphi 0, %s226
      %s244 = sphi 0, %s244
      %s246 = sphi 0, %s244
      %s247 = sphi 0, %s246
      %s261 = sphi 0, %s247
      %s265 = sphi 0, %s265
      %s267 = sphi 0, %s265
      %s268 = sphi 0, %s267
      %s282 = sphi 0, %s268
      %s286 = sphi 0, %s286
      %s288 = sphi 0, %s286
      %s289 = sphi 0, %s288
      %s303 = sphi 0, %s289
      %s307 = sphi 0, %s307
      %s309 = sphi 0, %s307
      %s310 = sphi 0, %s309
      %s324 = sphi 0, %s310
      %s328 = sphi 0, %s328
      %s330 = sphi 0, %s328
      %s331 = sphi 0, %s330
      %s345 = sphi 0, %s331
      %s353 = sphi 0, %s355
      %s356 = sphi 0, %s353
      %s357 = sphi 0, %s356
      %s373 = sphi 0, %s357
    $region4: #{tpu_custom_call.1} parent=1 // loop_header_branch
      %37 = sbr.rel (%p35) target = $region8
    $region5: #{tpu_custom_call.1} parent=1 // loop_body
      %s39 = ssub.s32 %s34, 1
      %s40 = ssub.s32 %s34, 2
      %s50 = sadd.s32 1, %s43
      %p51 = scmp.ge.s32.totalorder %s50, 2
      %s52 = scalar_select %p51, 0, %s50
      %s53 = sadd.s32 1, %s42
      %s54 = scalar_select %p51, %s53, %s42
      %p55 = scmp.ge.s32.totalorder %s54, 2
      %s56 = scalar_select %p55, 0, %s54
      %s57 = sadd.s32 1, %s41
      %s58 = scalar_select %p55, %s57, %s41
      %p59 = scmp.ge.s32.totalorder %s58, 2
      %s60 = scalar_select %p59, 0, %s58
      %s61 = ssub.s32 %s41, %s60
      %s62 = ssub.s32 %s42, %s56
      %s63 = sor.u32 %s61, %s62
      %p64 = scmp.eq.s32.totalorder %s63, 0
      %s66 = sadd.s32 %s65, 1
      %s67 = scalar_select %p64, %s65, %s66
      %p70 = pneg %p64
      %p71 = scmp.eq.s32.totalorder %s34, 7
      %p72 = por %p70, %p71
      %p73 = scmp.ne.s32.totalorder %s65, %s68
      %p74 = scmp.eq.s32.totalorder %s34, 0
      %p75 = por %p73, %p74
      %p76 = scmp.ne.s32.totalorder %s65, %s68
      %p77 = scmp.eq.s32.totalorder %s39, 7
      %p78 = por %p76, %p77
      %p79 = scmp.ne.s32.totalorder %s68, %s69
      %p80 = scmp.eq.s32.totalorder %s39, 0
      %p81 = por %p79, %p80
      %p82 = scmp.ne.s32.totalorder %s68, %s69
      %p83 = scmp.eq.s32.totalorder %s40, 7
      %p84 = por %p82, %p83
      %p86 = scmp.ne.s32.totalorder %s69, %s85
      %p87 = scmp.eq.s32.totalorder %s40, 0
      %p88 = por %p86, %p87
      %p89 = scmp.eq.s32.totalorder %s42, 0
      %s90 = scalar_select %p89, %s43, 0
      %p91 = scmp.eq.s32.totalorder %s56, 0
      %s92 = scalar_select %p91, %s52, 0
      %s93 = ssub.s32 %s41, %s60
      %s94 = ssub.s32 %s90, %s92
      %s95 = sor.u32 %s93, %s94
      %p96 = scmp.eq.s32.totalorder %s95, 0
      %s98 = sadd.s32 %s97, 1
      %s99 = scalar_select %p96, %s97, %s98
      %p102 = pneg %p96
      %p103 = scmp.eq.s32.totalorder %s34, 7
      %p104 = por %p102, %p103
      %p105 = scmp.ne.s32.totalorder %s97, %s100
      %p106 = scmp.eq.s32.totalorder %s34, 0
      %p107 = por %p105, %p106
      %p108 = scmp.ne.s32.totalorder %s97, %s100
      %p109 = scmp.eq.s32.totalorder %s39, 7
      %p110 = por %p108, %p109
      %p111 = scmp.ne.s32.totalorder %s100, %s101
      %p112 = scmp.eq.s32.totalorder %s39, 0
      %p113 = por %p111, %p112
      %p114 = scmp.ne.s32.totalorder %s100, %s101
      %p115 = scmp.eq.s32.totalorder %s40, 7
      %p116 = por %p114, %p115
      %p118 = scmp.ne.s32.totalorder %s101, %s117
      %p119 = scmp.eq.s32.totalorder %s40, 0
      %p120 = por %p118, %p119
      %p121 = scmp.eq.s32.totalorder %s42, 0
      %s122 = scalar_select %p121, %s43, 0
      %p123 = scmp.eq.s32.totalorder %s56, 0
      %s124 = scalar_select %p123, %s52, 0
      %s125 = ssub.s32 %s41, %s60
      %s126 = ssub.s32 %s122, %s124
      %s127 = sor.u32 %s125, %s126
      %p128 = scmp.eq.s32.totalorder %s127, 0
      %s130 = sadd.s32 %s129, 1
      %s131 = scalar_select %p128, %s129, %s130
      %p134 = pneg %p128
      %p135 = scmp.eq.s32.totalorder %s34, 7
      %p136 = por %p134, %p135
      %p137 = scmp.ne.s32.totalorder %s129, %s132
      %p138 = scmp.eq.s32.totalorder %s34, 0
      %p139 = por %p137, %p138
      %p140 = scmp.ne.s32.totalorder %s129, %s132
      %p141 = scmp.eq.s32.totalorder %s39, 7
      %p142 = por %p140, %p141
      %p143 = scmp.ne.s32.totalorder %s132, %s133
      %p144 = scmp.eq.s32.totalorder %s39, 0
      %p145 = por %p143, %p144
      %p146 = scmp.ne.s32.totalorder %s132, %s133
      %p147 = scmp.eq.s32.totalorder %s40, 7
      %p148 = por %p146, %p147
      %p150 = scmp.ne.s32.totalorder %s133, %s149
      %p151 = scmp.eq.s32.totalorder %s40, 0
      %p152 = por %p150, %p151
      %s153 = ssub.s32 %s41, %s60
      %s154 = ssub.s32 %s43, %s52
      %s155 = sor.u32 %s153, %s154
      %p156 = scmp.eq.s32.totalorder %s155, 0
      %s158 = sadd.s32 %s157, 1
      %s159 = scalar_select %p156, %s157, %s158
      %p162 = pneg %p156
      %p163 = scmp.eq.s32.totalorder %s34, 7
      %p164 = por %p162, %p163
      %p165 = scmp.ne.s32.totalorder %s157, %s160
      %p166 = scmp.eq.s32.totalorder %s34, 0
      %p167 = por %p165, %p166
      %p168 = scmp.ne.s32.totalorder %s157, %s160
      %p169 = scmp.eq.s32.totalorder %s39, 7
      %p170 = por %p168, %p169
      %p171 = scmp.ne.s32.totalorder %s160, %s161
      %p172 = scmp.eq.s32.totalorder %s39, 0
      %p173 = por %p171, %p172
      %p174 = scmp.ne.s32.totalorder %s160, %s161
      %p175 = scmp.eq.s32.totalorder %s40, 7
      %p176 = por %p174, %p175
      %p178 = scmp.ne.s32.totalorder %s161, %s177
      %p179 = scmp.eq.s32.totalorder %s40, 0
      %p180 = por %p178, %p179
      %s182 = sadd.s32 %s181, 1
      %p185 = scmp.eq.s32.totalorder %s34, 7
      %p186 = scmp.ne.s32.totalorder %s181, %s183
      %p187 = scmp.eq.s32.totalorder %s34, 0
      %p188 = por %p186, %p187
      %p189 = scmp.ne.s32.totalorder %s181, %s183
      %p190 = scmp.eq.s32.totalorder %s39, 7
      %p191 = por %p189, %p190
      %p192 = scmp.ne.s32.totalorder %s183, %s184
      %p193 = scmp.eq.s32.totalorder %s39, 0
      %p194 = por %p192, %p193
      %p195 = scmp.ne.s32.totalorder %s183, %s184
      %p196 = scmp.eq.s32.totalorder %s40, 7
      %p197 = por %p195, %p196
      %p199 = scmp.ne.s32.totalorder %s184, %s198
      %p200 = scmp.eq.s32.totalorder %s40, 0
      %p201 = por %p199, %p200
      %s203 = sadd.s32 %s202, 1
      %p206 = scmp.eq.s32.totalorder %s34, 7
      %p207 = scmp.ne.s32.totalorder %s202, %s204
      %p208 = scmp.eq.s32.totalorder %s34, 0
      %p209 = por %p207, %p208
      %p210 = scmp.ne.s32.totalorder %s202, %s204
      %p211 = scmp.eq.s32.totalorder %s39, 7
      %p212 = por %p210, %p211
      %p213 = scmp.ne.s32.totalorder %s204, %s205
      %p214 = scmp.eq.s32.totalorder %s39, 0
      %p215 = por %p213, %p214
      %p216 = scmp.ne.s32.totalorder %s204, %s205
      %p217 = scmp.eq.s32.totalorder %s40, 7
      %p218 = por %p216, %p217
      %p220 = scmp.ne.s32.totalorder %s205, %s219
      %p221 = scmp.eq.s32.totalorder %s40, 0
      %p222 = por %p220, %p221
      %s224 = sadd.s32 %s223, 1
      %p227 = scmp.eq.s32.totalorder %s34, 7
      %p228 = scmp.ne.s32.totalorder %s223, %s225
      %p229 = scmp.eq.s32.totalorder %s34, 0
      %p230 = por %p228, %p229
      %p231 = scmp.ne.s32.totalorder %s223, %s225
      %p232 = scmp.eq.s32.totalorder %s39, 7
      %p233 = por %p231, %p232
      %p234 = scmp.ne.s32.totalorder %s225, %s226
      %p235 = scmp.eq.s32.totalorder %s39, 0
      %p236 = por %p234, %p235
      %p237 = scmp.ne.s32.totalorder %s225, %s226
      %p238 = scmp.eq.s32.totalorder %s40, 7
      %p239 = por %p237, %p238
      %p241 = scmp.ne.s32.totalorder %s226, %s240
      %p242 = scmp.eq.s32.totalorder %s40, 0
      %p243 = por %p241, %p242
      %s245 = sadd.s32 %s244, 1
      %p248 = scmp.eq.s32.totalorder %s34, 7
      %p249 = scmp.ne.s32.totalorder %s244, %s246
      %p250 = scmp.eq.s32.totalorder %s34, 0
      %p251 = por %p249, %p250
      %p252 = scmp.ne.s32.totalorder %s244, %s246
      %p253 = scmp.eq.s32.totalorder %s39, 7
      %p254 = por %p252, %p253
      %p255 = scmp.ne.s32.totalorder %s246, %s247
      %p256 = scmp.eq.s32.totalorder %s39, 0
      %p257 = por %p255, %p256
      %p258 = scmp.ne.s32.totalorder %s246, %s247
      %p259 = scmp.eq.s32.totalorder %s40, 7
      %p260 = por %p258, %p259
      %p262 = scmp.ne.s32.totalorder %s247, %s261
      %p263 = scmp.eq.s32.totalorder %s40, 0
      %p264 = por %p262, %p263
      %s266 = sadd.s32 %s265, 1
      %p269 = scmp.eq.s32.totalorder %s34, 7
      %p270 = scmp.ne.s32.totalorder %s265, %s267
      %p271 = scmp.eq.s32.totalorder %s34, 0
      %p272 = por %p270, %p271
      %p273 = scmp.ne.s32.totalorder %s265, %s267
      %p274 = scmp.eq.s32.totalorder %s39, 7
      %p275 = por %p273, %p274
      %p276 = scmp.ne.s32.totalorder %s267, %s268
      %p277 = scmp.eq.s32.totalorder %s39, 0
      %p278 = por %p276, %p277
      %p279 = scmp.ne.s32.totalorder %s267, %s268
      %p280 = scmp.eq.s32.totalorder %s40, 7
      %p281 = por %p279, %p280
      %p283 = scmp.ne.s32.totalorder %s268, %s282
      %p284 = scmp.eq.s32.totalorder %s40, 0
      %p285 = por %p283, %p284
      %s287 = sadd.s32 %s286, 1
      %p290 = scmp.eq.s32.totalorder %s34, 7
      %p291 = scmp.ne.s32.totalorder %s286, %s288
      %p292 = scmp.eq.s32.totalorder %s34, 0
      %p293 = por %p291, %p292
      %p294 = scmp.ne.s32.totalorder %s286, %s288
      %p295 = scmp.eq.s32.totalorder %s39, 7
      %p296 = por %p294, %p295
      %p297 = scmp.ne.s32.totalorder %s288, %s289
      %p298 = scmp.eq.s32.totalorder %s39, 0
      %p299 = por %p297, %p298
      %p300 = scmp.ne.s32.totalorder %s288, %s289
      %p301 = scmp.eq.s32.totalorder %s40, 7
      %p302 = por %p300, %p301
      %p304 = scmp.ne.s32.totalorder %s289, %s303
      %p305 = scmp.eq.s32.totalorder %s40, 0
      %p306 = por %p304, %p305
      %s308 = sadd.s32 %s307, 1
      %p311 = scmp.eq.s32.totalorder %s34, 7
      %p312 = scmp.ne.s32.totalorder %s307, %s309
      %p313 = scmp.eq.s32.totalorder %s34, 0
      %p314 = por %p312, %p313
      %p315 = scmp.ne.s32.totalorder %s307, %s309
      %p316 = scmp.eq.s32.totalorder %s39, 7
      %p317 = por %p315, %p316
      %p318 = scmp.ne.s32.totalorder %s309, %s310
      %p319 = scmp.eq.s32.totalorder %s39, 0
      %p320 = por %p318, %p319
      %p321 = scmp.ne.s32.totalorder %s309, %s310
      %p322 = scmp.eq.s32.totalorder %s40, 7
      %p323 = por %p321, %p322
      %p325 = scmp.ne.s32.totalorder %s310, %s324
      %p326 = scmp.eq.s32.totalorder %s40, 0
      %p327 = por %p325, %p326
      %s329 = sadd.s32 %s328, 1
      %p332 = scmp.eq.s32.totalorder %s34, 7
      %p333 = scmp.ne.s32.totalorder %s328, %s330
      %p334 = scmp.eq.s32.totalorder %s34, 0
      %p335 = por %p333, %p334
      %p336 = scmp.ne.s32.totalorder %s328, %s330
      %p337 = scmp.eq.s32.totalorder %s39, 7
      %p338 = por %p336, %p337
      %p339 = scmp.ne.s32.totalorder %s330, %s331
      %p340 = scmp.eq.s32.totalorder %s39, 0
      %p341 = por %p339, %p340
      %p342 = scmp.ne.s32.totalorder %s330, %s331
      %p343 = scmp.eq.s32.totalorder %s40, 7
      %p344 = por %p342, %p343
      %p346 = scmp.ne.s32.totalorder %s331, %s345
      %p347 = scmp.eq.s32.totalorder %s40, 0
      %p348 = por %p346, %p347
      %s349 = ssub.s32 %s41, %s60
      %s350 = ssub.s32 %s42, %s56
      %s351 = sor.u32 %s349, %s350
      %p352 = scmp.eq.s32.totalorder %s351, 0
      %s354 = sadd.s32 %s353, 1
      %s355 = scalar_select %p352, %s353, %s354
      %p358 = pneg %p352
      %p359 = scmp.eq.s32.totalorder %s34, 7
      %p360 = por %p358, %p359
      %p361 = scmp.ne.s32.totalorder %s353, %s356
      %p362 = scmp.eq.s32.totalorder %s34, 0
      %p363 = por %p361, %p362
      %p364 = scmp.ne.s32.totalorder %s353, %s356
      %p365 = scmp.eq.s32.totalorder %s39, 7
      %p366 = por %p364, %p365
      %p367 = scmp.ne.s32.totalorder %s356, %s357
      %p368 = scmp.eq.s32.totalorder %s39, 0
      %p369 = por %p367, %p368
      %p370 = scmp.ne.s32.totalorder %s356, %s357
      %p371 = scmp.eq.s32.totalorder %s40, 7
      %p372 = por %p370, %p371
      %p374 = scmp.ne.s32.totalorder %s357, %s373
      %p375 = scmp.eq.s32.totalorder %s40, 0
      %p376 = por %p374, %p375
      %p377 = scmp.le.s32.totalorder 1, %s34
      %p378 = scmp.lt.s32.totalorder %s34, 9
      %p379 = pnand %p377, %p378
      %p380 = pneg %p379
      // Predicated region
      $region9: #{tpu_custom_call.1} parent=5 // pred_check
        _
      $region10: #{tpu_custom_call.1} parent=5 // pred_check_branch
        %382 = sbr.rel (%p379) target = $region12
      $region11: #{tpu_custom_call.1} parent=5 // pred_region
        %s383 = ssub.s32 %s34, 1
        // Predicated region
        $region13: #{tpu_custom_call.1} parent=11 // pred_check
          %p384 = pneg %p194
        $region14: #{tpu_custom_call.1} parent=11 // pred_check_branch
          %386 = sbr.rel (%p384) target = $region16
        $region15: #{tpu_custom_call.1} parent=11 // pred_region
          %s388 = ssub.s32 512, 512
          %389 = vsyncadd [#allocation15], %s388
          %s390 = sshll.u32 [#allocation16], 4
          %s391 = int_to_ptr.vmem [resolvable:$true] %s390
          %396 = dma.hbm_to_vmem [thread:$0]  %s4, 512, %s391, [#allocation15], 128, 128, 8
        $region16: #{tpu_custom_call.1} parent=11 // pred_fallthru
          _
        // Predicated region
        $region17: #{tpu_custom_call.1} parent=11 // pred_check
          %p397 = pneg %p215
        $region18: #{tpu_custom_call.1} parent=11 // pred_check_branch
          %399 = sbr.rel (%p397) target = $region20
        $region19: #{tpu_custom_call.1} parent=11 // pred_region
          %s401 = ssub.s32 16, 16
          %402 = vsyncadd [#allocation18], %s401
          %s404 = sshll.u32 [#allocation17], 4
          %s405 = int_to_ptr.vmem [resolvable:$true] %s404
          %407 = dma.hbm_to_vmem [thread:$0]  %s5, 16, %s405, [#allocation18]
        $region20: #{tpu_custom_call.1} parent=11 // pred_fallthru
          _
        // Predicated region
        $region21: #{tpu_custom_call.1} parent=11 // pred_check
          %p408 = pneg %p236
        $region22: #{tpu_custom_call.1} parent=11 // pred_check_branch
          %410 = sbr.rel (%p408) target = $region24
        $region23: #{tpu_custom_call.1} parent=11 // pred_region
          %s412 = ssub.s32 512, 512
          %413 = vsyncadd [#allocation18], %s412
          %s414 = sshll.u32 [#allocation19], 4
          %s415 = int_to_ptr.vmem [resolvable:$true] %s414
          %420 = dma.hbm_to_vmem [thread:$0]  %s6, 512, %s415, [#allocation18], 128, 128, 8
        $region24: #{tpu_custom_call.1} parent=11 // pred_fallthru
          _
        // Predicated region
        $region25: #{tpu_custom_call.1} parent=11 // pred_check
          %p421 = pneg %p257
        $region26: #{tpu_custom_call.1} parent=11 // pred_check_branch
          %423 = sbr.rel (%p421) target = $region28
        $region27: #{tpu_custom_call.1} parent=11 // pred_region
          %s425 = ssub.s32 16, 16
          %426 = vsyncadd [#allocation21], %s425
          %s428 = sshll.u32 [#allocation20], 4
          %s429 = int_to_ptr.vmem [resolvable:$true] %s428
          %431 = dma.hbm_to_vmem [thread:$0]  %s7, 16, %s429, [#allocation21]
        $region28: #{tpu_custom_call.1} parent=11 // pred_fallthru
          _
        // Predicated region
        $region29: #{tpu_custom_call.1} parent=11 // pred_check
          %p432 = pneg %p278
        $region30: #{tpu_custom_call.1} parent=11 // pred_check_branch
          %434 = sbr.rel (%p432) target = $region32
        $region31: #{tpu_custom_call.1} parent=11 // pred_region
          %s436 = ssub.s32 512, 512
          %437 = vsyncadd [#allocation21], %s436
          %s438 = sshll.u32 [#allocation22], 4
          %s439 = int_to_ptr.vmem [resolvable:$true] %s438
          %444 = dma.hbm_to_vmem [thread:$0]  %s8, 512, %s439, [#allocation21], 128, 128, 8
        $region32: #{tpu_custom_call.1} parent=11 // pred_fallthru
          _
        // Predicated region
        $region33: #{tpu_custom_call.1} parent=11 // pred_check
          %p445 = pneg %p299
        $region34: #{tpu_custom_call.1} parent=11 // pred_check_branch
          %447 = sbr.rel (%p445) target = $region36
        $region35: #{tpu_custom_call.1} parent=11 // pred_region
          %s449 = ssub.s32 16, 16
          %450 = vsyncadd [#allocation24], %s449
          %s452 = sshll.u32 [#allocation23], 4
          %s453 = int_to_ptr.vmem [resolvable:$true] %s452
          %455 = dma.hbm_to_vmem [thread:$0]  %s9, 16, %s453, [#allocation24]
        $region36: #{tpu_custom_call.1} parent=11 // pred_fallthru
          _
        // Predicated region
        $region37: #{tpu_custom_call.1} parent=11 // pred_check
          %p456 = pneg %p320
        $region38: #{tpu_custom_call.1} parent=11 // pred_check_branch
          %458 = sbr.rel (%p456) target = $region40
        $region39: #{tpu_custom_call.1} parent=11 // pred_region
          %s460 = ssub.s32 512, 512
          %461 = vsyncadd [#allocation24], %s460
          %s462 = sshll.u32 [#allocation25], 4
          %s463 = int_to_ptr.vmem [resolvable:$true] %s462
          %468 = dma.hbm_to_vmem [thread:$0]  %s10, 512, %s463, [#allocation24], 128, 128, 8
        $region40: #{tpu_custom_call.1} parent=11 // pred_fallthru
          _
        // Predicated region
        $region41: #{tpu_custom_call.1} parent=11 // pred_check
          %p469 = pneg %p341
        $region42: #{tpu_custom_call.1} parent=11 // pred_check_branch
          %471 = sbr.rel (%p469) target = $region44
        $region43: #{tpu_custom_call.1} parent=11 // pred_region
          %s473 = ssub.s32 16, 16
          %474 = vsyncadd [#allocation27], %s473
          %s476 = sshll.u32 [#allocation26], 4
          %s477 = int_to_ptr.vmem [resolvable:$true] %s476
          %479 = dma.hbm_to_vmem [thread:$0]  %s11, 16, %s477, [#allocation27]
        $region44: #{tpu_custom_call.1} parent=11 // pred_fallthru
          _
      $region12: #{tpu_custom_call.1} parent=5 // pred_fallthru
        _
      %p480 = scmp.lt.s32.totalorder %s34, 8
      // Predicated region
      $region45: #{tpu_custom_call.1} parent=5 // pred_check
        %p481 = pneg %p480
      $region46: #{tpu_custom_call.1} parent=5 // pred_check_branch
        %483 = sbr.rel (%p481) target = $region48
      $region47: #{tpu_custom_call.1} parent=5 // pred_region
        // Predicated region
        $region49: #{tpu_custom_call.1} parent=47 // pred_check
          %p484 = pneg %p75
        $region50: #{tpu_custom_call.1} parent=47 // pred_check_branch
          %486 = sbr.rel (%p484) target = $region52
        $region51: #{tpu_custom_call.1} parent=47 // pred_region
          %s487 = sand.u32 %s65, 1
          %s488 = scalar_lea.sflag [#allocation9], %s487
          %s489 = sand.u32 %s65, 1
          %s490 = smul.addr %s489, 8
          %s491 = scalar_lea.vmem [#allocation8], %s490
          %s493 = ssub.s32 128, 128
          %494 = vsyncadd %s488, %s493
          %s495 = smul.addr %s41, 2
          %s496 = sadd.s32 %s42, %s495
          %s497 = smul.addr %s496, 128
          %s498 = scalar_lea.hbm %s0, %s497
          %s500 = sshll.u32 %s491, 4
          %s501 = int_to_ptr.vmem [resolvable:$true] %s500
          %503 = dma.hbm_to_vmem [thread:$0]  %s498, 128, %s501, %s488
        $region52: #{tpu_custom_call.1} parent=47 // pred_fallthru
          _
        // Predicated region
        $region53: #{tpu_custom_call.1} parent=47 // pred_check
          %p504 = pneg %p107
        $region54: #{tpu_custom_call.1} parent=47 // pred_check_branch
          %506 = sbr.rel (%p504) target = $region56
        $region55: #{tpu_custom_call.1} parent=47 // pred_region
          %s507 = sand.u32 %s34, 1
          %s508 = scalar_lea.sflag [#allocation12], %s507
          %s509 = sand.u32 %s97, 1
          %s510 = smul.addr %s509, 8
          %s511 = scalar_lea.vmem [#allocation11], %s510
          %p512 = scmp.eq.s32.totalorder %s42, 0
          %s513 = scalar_select %p512, %s43, 0
          %s515 = ssub.s32 128, 128
          %516 = vsyncadd %s508, %s515
          %s517 = smul.addr %s41, 2
          %s518 = sadd.s32 %s513, %s517
          %s519 = smul.addr %s518, 128
          %s520 = scalar_lea.hbm %s1, %s519
          %s522 = sshll.u32 %s511, 4
          %s523 = int_to_ptr.vmem [resolvable:$true] %s522
          %525 = dma.hbm_to_vmem [thread:$0]  %s520, 128, %s523, %s508
        $region56: #{tpu_custom_call.1} parent=47 // pred_fallthru
          _
        // Predicated region
        $region57: #{tpu_custom_call.1} parent=47 // pred_check
          %p526 = pneg %p139
        $region58: #{tpu_custom_call.1} parent=47 // pred_check_branch
          %528 = sbr.rel (%p526) target = $region60
        $region59: #{tpu_custom_call.1} parent=47 // pred_region
          %s529 = sand.u32 %s34, 1
          %s530 = scalar_lea.sflag [#allocation12], %s529
          %s531 = sand.u32 %s129, 1
          %s532 = smul.addr %s531, 8
          %s533 = scalar_lea.vmem [#allocation13], %s532
          %p534 = scmp.eq.s32.totalorder %s42, 0
          %s535 = scalar_select %p534, %s43, 0
          %s537 = ssub.s32 128, 128
          %538 = vsyncadd %s530, %s537
          %s539 = smul.addr %s41, 2
          %s540 = sadd.s32 %s535, %s539
          %s541 = smul.addr %s540, 128
          %s542 = scalar_lea.hbm %s2, %s541
          %s544 = sshll.u32 %s533, 4
          %s545 = int_to_ptr.vmem [resolvable:$true] %s544
          %547 = dma.hbm_to_vmem [thread:$0]  %s542, 128, %s545, %s530
        $region60: #{tpu_custom_call.1} parent=47 // pred_fallthru
          _
        // Predicated region
        $region61: #{tpu_custom_call.1} parent=47 // pred_check
          %p548 = pneg %p167
        $region62: #{tpu_custom_call.1} parent=47 // pred_check_branch
          %550 = sbr.rel (%p548) target = $region64
        $region63: #{tpu_custom_call.1} parent=47 // pred_region
          %s551 = sand.u32 %s34, 1
          %s552 = scalar_lea.sflag [#allocation15], %s551
          %s553 = sand.u32 %s157, 1
          %s554 = scalar_lea.vmem [#allocation14], %s553
          %s556 = ssub.s32 16, 16
          %557 = vsyncadd %s552, %s556
          %s558 = smul.addr %s41, 2
          %s559 = sadd.s32 %s43, %s558
          %s560 = smul.addr %s559, 16
          %s561 = scalar_lea.hbm %s3, %s560
          %s563 = sshll.u32 %s554, 4
          %s564 = int_to_ptr.vmem [resolvable:$true] %s563
          %566 = dma.hbm_to_vmem [thread:$0]  %s561, 16, %s564, %s552
        $region64: #{tpu_custom_call.1} parent=47 // pred_fallthru
          _
      $region48: #{tpu_custom_call.1} parent=5 // pred_fallthru
        _
      %p567 = scmp.le.s32.totalorder 1, %s34
      %p568 = scmp.lt.s32.totalorder %s34, 9
      %p569 = pnand %p567, %p568
      %p570 = pneg %p569
      // Predicated region
      $region65: #{tpu_custom_call.1} parent=5 // pred_check
        _
      $region66: #{tpu_custom_call.1} parent=5 // pred_check_branch
        %572 = sbr.rel (%p569) target = $region68
      $region67: #{tpu_custom_call.1} parent=5 // pred_region
        %s573 = ssub.s32 %s34, 1
        %s574 = sand.u32 %s68, 1
        %s575 = scalar_lea.sflag [#allocation9], %s574
        %s576 = sand.u32 %s68, 1
        %s577 = smul.addr %s576, 8
        %s578 = scalar_lea.vmem [#allocation8], %s577
        // Predicated region
        $region69: #{tpu_custom_call.1} parent=67 // pred_check
          %p579 = pneg %p81
        $region70: #{tpu_custom_call.1} parent=67 // pred_check_branch
          %581 = sbr.rel (%p579) target = $region72
        $region71: #{tpu_custom_call.1} parent=67 // pred_region
          %582 = dma.done %s575, 128
        $region72: #{tpu_custom_call.1} parent=67 // pred_fallthru
          _
        %s583 = sand.u32 %s39, 1
        %s584 = scalar_lea.sflag [#allocation12], %s583
        %s585 = sand.u32 %s100, 1
        %s586 = smul.addr %s585, 8
        %s587 = scalar_lea.vmem [#allocation11], %s586
        // Predicated region
        $region73: #{tpu_custom_call.1} parent=67 // pred_check
          %p588 = pneg %p113
        $region74: #{tpu_custom_call.1} parent=67 // pred_check_branch
          %590 = sbr.rel (%p588) target = $region76
        $region75: #{tpu_custom_call.1} parent=67 // pred_region
          %591 = dma.done %s584, 128
        $region76: #{tpu_custom_call.1} parent=67 // pred_fallthru
          _
        %s592 = sand.u32 %s39, 1
        %s593 = scalar_lea.sflag [#allocation12], %s592
        %s594 = sand.u32 %s132, 1
        %s595 = smul.addr %s594, 8
        %s596 = scalar_lea.vmem [#allocation13], %s595
        // Predicated region
        $region77: #{tpu_custom_call.1} parent=67 // pred_check
          %p597 = pneg %p145
        $region78: #{tpu_custom_call.1} parent=67 // pred_check_branch
          %599 = sbr.rel (%p597) target = $region80
        $region79: #{tpu_custom_call.1} parent=67 // pred_region
          %600 = dma.done %s593, 128
        $region80: #{tpu_custom_call.1} parent=67 // pred_fallthru
          _
        %s601 = sand.u32 %s39, 1
        %s602 = scalar_lea.sflag [#allocation15], %s601
        %s603 = sand.u32 %s160, 1
        %s604 = scalar_lea.vmem [#allocation14], %s603
        // Predicated region
        $region81: #{tpu_custom_call.1} parent=67 // pred_check
          %p605 = pneg %p173
        $region82: #{tpu_custom_call.1} parent=67 // pred_check_branch
          %607 = sbr.rel (%p605) target = $region84
        $region83: #{tpu_custom_call.1} parent=67 // pred_region
          %608 = dma.done %s602, 16
        $region84: #{tpu_custom_call.1} parent=67 // pred_fallthru
          _
        // Predicated region
        $region85: #{tpu_custom_call.1} parent=67 // pred_check
          %p609 = pneg %p194
        $region86: #{tpu_custom_call.1} parent=67 // pred_check_branch
          %611 = sbr.rel (%p609) target = $region88
        $region87: #{tpu_custom_call.1} parent=67 // pred_region
          %612 = dma.done [#allocation15], 512
        $region88: #{tpu_custom_call.1} parent=67 // pred_fallthru
          _
        // Predicated region
        $region89: #{tpu_custom_call.1} parent=67 // pred_check
          %p613 = pneg %p215
        $region90: #{tpu_custom_call.1} parent=67 // pred_check_branch
          %615 = sbr.rel (%p613) target = $region92
        $region91: #{tpu_custom_call.1} parent=67 // pred_region
          %616 = dma.done [#allocation18], 16
        $region92: #{tpu_custom_call.1} parent=67 // pred_fallthru
          _
        // Predicated region
        $region93: #{tpu_custom_call.1} parent=67 // pred_check
          %p617 = pneg %p236
        $region94: #{tpu_custom_call.1} parent=67 // pred_check_branch
          %619 = sbr.rel (%p617) target = $region96
        $region95: #{tpu_custom_call.1} parent=67 // pred_region
          %620 = dma.done [#allocation18], 512
        $region96: #{tpu_custom_call.1} parent=67 // pred_fallthru
          _
        // Predicated region
        $region97: #{tpu_custom_call.1} parent=67 // pred_check
          %p621 = pneg %p257
        $region98: #{tpu_custom_call.1} parent=67 // pred_check_branch
          %623 = sbr.rel (%p621) target = $region100
        $region99: #{tpu_custom_call.1} parent=67 // pred_region
          %624 = dma.done [#allocation21], 16
        $region100: #{tpu_custom_call.1} parent=67 // pred_fallthru
          _
        // Predicated region
        $region101: #{tpu_custom_call.1} parent=67 // pred_check
          %p625 = pneg %p278
        $region102: #{tpu_custom_call.1} parent=67 // pred_check_branch
          %627 = sbr.rel (%p625) target = $region104
        $region103: #{tpu_custom_call.1} parent=67 // pred_region
          %628 = dma.done [#allocation21], 512
        $region104: #{tpu_custom_call.1} parent=67 // pred_fallthru
          _
        // Predicated region
        $region105: #{tpu_custom_call.1} parent=67 // pred_check
          %p629 = pneg %p299
        $region106: #{tpu_custom_call.1} parent=67 // pred_check_branch
          %631 = sbr.rel (%p629) target = $region108
        $region107: #{tpu_custom_call.1} parent=67 // pred_region
          %632 = dma.done [#allocation24], 16
        $region108: #{tpu_custom_call.1} parent=67 // pred_fallthru
          _
        // Predicated region
        $region109: #{tpu_custom_call.1} parent=67 // pred_check
          %p633 = pneg %p320
        $region110: #{tpu_custom_call.1} parent=67 // pred_check_branch
          %635 = sbr.rel (%p633) target = $region112
        $region111: #{tpu_custom_call.1} parent=67 // pred_region
          %636 = dma.done [#allocation24], 512
        $region112: #{tpu_custom_call.1} parent=67 // pred_fallthru
          _
        // Predicated region
        $region113: #{tpu_custom_call.1} parent=67 // pred_check
          %p637 = pneg %p341
        $region114: #{tpu_custom_call.1} parent=67 // pred_check_branch
          %639 = sbr.rel (%p637) target = $region116
        $region115: #{tpu_custom_call.1} parent=67 // pred_region
          %640 = dma.done [#allocation27], 16
        $region116: #{tpu_custom_call.1} parent=67 // pred_fallthru
          _
        %s641 = sand.u32 %s68, 1
        %s642 = scalar_lea.sflag [#allocation9], %s641
        %s643 = sand.u32 %s68, 1
        %s644 = smul.addr %s643, 8
        %s645 = scalar_lea.vmem [#allocation8], %s644
        %p646 = pneg %p81
        %p647 = pneg %p78
        %s648 = sand.u32 %s39, 1
        %s649 = scalar_lea.sflag [#allocation12], %s648
        %s650 = sand.u32 %s100, 1
        %s651 = smul.addr %s650, 8
        %s652 = scalar_lea.vmem [#allocation11], %s651
        %p653 = pneg %p113
        %p654 = pneg %p110
        %s655 = sand.u32 %s39, 1
        %s656 = scalar_lea.sflag [#allocation12], %s655
        %s657 = sand.u32 %s132, 1
        %s658 = smul.addr %s657, 8
        %s659 = scalar_lea.vmem [#allocation13], %s658
        %p660 = pneg %p145
        %p661 = pneg %p142
        %s662 = sand.u32 %s39, 1
        %s663 = scalar_lea.sflag [#allocation15], %s662
        %s664 = sand.u32 %s160, 1
        %s665 = scalar_lea.vmem [#allocation14], %s664
        %p666 = pneg %p173
        %p667 = pneg %p170
        %p668 = pneg %p194
        %p669 = pneg %p191
        %p670 = pneg %p215
        %p671 = pneg %p212
        %p672 = pneg %p236
        %p673 = pneg %p233
        %p674 = pneg %p257
        %p675 = pneg %p254
        %p676 = pneg %p278
        %p677 = pneg %p275
        %p678 = pneg %p299
        %p679 = pneg %p296
        %p680 = pneg %p320
        %p681 = pneg %p317
        %p682 = pneg %p341
        %p683 = pneg %p338
        %p684 = pneg %p369
        %p685 = pneg %p366
        %s686 = sand.u32 %s356, 1
        %s687 = scalar_lea.sflag [#allocation10], %s686
        %s688 = sand.u32 %s356, 1
        %s689 = smul.addr %s688, 8
        %s690 = scalar_lea.vmem [#allocation28], %s689
        %p691 = scmp.eq.s32.totalorder %s45, 0
        %s692 = scalar_select %p691, %s46, 0
        %p693 = scmp.eq.s32.totalorder %s45, 0
        %s694 = scalar_select %p693, %s46, 0
        %p697 = scmp.eq.s32.totalorder %s46, 0
        // Predicated region
        $region117: #{tpu_custom_call.1} parent=67 // pred_check
          %p698 = pneg %p697
        $region118: #{tpu_custom_call.1} parent=67 // pred_check_branch
          %700 = sbr.rel (%p698) target = $region120
        $region119: #{tpu_custom_call.1} parent=67 // pred_region
          %v701 = vld [vmem:[%s578] sm:$0xff]
          %v702 = vld [vmem:[#allocation16] sm:$0xff]
          %v703 = vld [vmem:[#allocation16 + $0x8] sm:$0xff]
          %v704 = vld [vmem:[#allocation16 + $0x10] sm:$0xff]
          %v705 = vld [vmem:[#allocation16 + $0x18] sm:$0xff]
          %v706 = vld [vmem:[#allocation17] sm:$0x1]
          %v708 = vlaneseq
          %v709 = vshrl.u32 %v708, 7
          %v710 = vsub.s32 0, %v709
          %v711 = vrot.slane %v706, %v710
          %vm713 = vcmask 261120
          %v715 = vsel %vm713, %v701, 0
          %717 = vmatprep.subr.mxu0 0.0
          %718 = vmatpush1.msra.mxu0 %v702
          %719 = vmatprep.subr.mxu0 0.0
          %720 = vmatpush1.msra.mxu0 %v703
          %721 = vmatprep.subr.mxu0 0.0
          %722 = vmatpush1.msra.mxu0 %v704
          %723 = vmatprep.subr.mxu0 0.0
          %724 = vmatpush1.msra.mxu0 %v705
          %725 = vmatprep.subr.mxu0 0.0
          %726 = vmatpush1.msra.mxu0 0.0
          %727 = vmatprep.subr.mxu0 0.0
          %728 = vmatpush1.msra.mxu0 0.0
          %729 = vmatprep.subr.mxu0 0.0
          %730 = vmatpush1.msra.mxu0 0.0
          %731 = vmatprep.subr.mxu0 0.0
          %732 = vmatpush1.msra.mxu0 0.0
          %733 = vmatprep.subr.mxu0 0.0
          %734 = vmatpush1.msra.mxu0 0.0
          %735 = vmatprep.subr.mxu0 0.0
          %736 = vmatpush1.msra.mxu0 0.0
          %737 = vmatprep.subr.mxu0 0.0
          %738 = vmatpush1.msra.mxu0 0.0
          %739 = vmatprep.subr.mxu0 0.0
          %740 = vmatpush1.msra.mxu0 0.0
          %741 = vmatprep.subr.mxu0 0.0
          %742 = vmatpush1.msra.mxu0 0.0
          %743 = vmatprep.subr.mxu0 0.0
          %744 = vmatpush1.msra.mxu0 0.0
          %745 = vmatprep.subr.mxu0 0.0
          %746 = vmatpush1.msra.mxu0 0.0
          %747 = vmatprep.subr.mxu0 0.0
          %748 = vmatpush1.msra.mxu0 0.0
          %749 = vmatprep.subr.mxu0 0.0
          %750 = vmatpush1.msra.mxu0 0.0
          %751 = vmatprep.subr.mxu0 0.0
          %752 = vmatpush1.msra.mxu0 0.0
          %753 = vmatprep.subr.mxu0 0.0
          %754 = vmatpush1.msra.mxu0 0.0
          %755 = vmatprep.subr.mxu0 0.0
          %756 = vmatpush1.msra.mxu0 0.0
          %757 = vmatprep.subr.mxu0 0.0
          %758 = vmatpush1.msra.mxu0 0.0
          %759 = vmatprep.subr.mxu0 0.0
          %760 = vmatpush1.msra.mxu0 0.0
          %761 = vmatprep.subr.mxu0 0.0
          %762 = vmatpush1.msra.mxu0 0.0
          %763 = vmatprep.subr.mxu0 0.0
          %764 = vmatpush1.msra.mxu0 0.0
          %765 = vmatprep.subr.mxu0 0.0
          %766 = vmatpush1.msra.mxu0 0.0
          %767 = vmatprep.subr.mxu0 0.0
          %768 = vmatpush1.msra.mxu0 0.0
          %769 = vmatprep.subr.mxu0 0.0
          %770 = vmatpush1.msra.mxu0 0.0
          %771 = vmatprep.subr.mxu0 0.0
          %772 = vmatpush1.msra.mxu0 0.0
          %773 = vmatprep.subr.mxu0 0.0
          %774 = vmatpush1.msra.mxu0 0.0
          %775 = vmatprep.subr.mxu0 0.0
          %776 = vmatpush1.msra.mxu0 0.0
          %777 = vmatprep.subr.mxu0 0.0
          %778 = vmatpush1.msra.mxu0 0.0
          %779 = vmatprep.subr.mxu0 0.0
          %780 = vmatpush1.msra.mxu0 0.0
          %781 = vmatprep.mubr.f32.mxu0 0.0
          %782 = vmatmul.mubr.f32.gmra.mrb[0].mxu0 %v715
          %v783 = vpop.f32.mrb[0].mxu0
          %v784 = vadd.f32 %v711, %v783
          %v785 = vpop.f32.mrb[0].mxu0
          %786 = vdwg.mxu0
          %788 = vrot.lane.b32.xlu0 %v784, 120
          %v789 = vpop.permute.xlu0 %788
          %791 = vrot.lane.b32.xlu0 %v784, 112
          %v792 = vpop.permute.xlu0 %791
          %794 = vrot.lane.b32.xlu0 %v784, 104
          %v795 = vpop.permute.xlu0 %794
          %v797 = vcombine.low %v784, %v792
          %v798 = vcombine.high %v784, %v792
          %v800 = vunpack.c.l.s4 1983009808
          %v801 = vunpack.c.0.s8 %v800
          %v802 = vlaneseq
          %v803 = vshrl.u32 %v802, 7
          %v804 = vsub.s32 %v801, %v803
          %v805 = vrot.slane %v797, %v804
          %v807 = vunpack.c.l.s4 1983009808
          %v808 = vunpack.c.0.s8 %v807
          %v809 = vlaneseq
          %v810 = vshrl.u32 %v809, 7
          %v811 = vsub.s32 %v808, %v810
          %v812 = vrot.slane %v798, %v811
          %v813 = vcombine.low %v789, %v795
          %v814 = vcombine.high %v789, %v795
          %v816 = vunpack.c.l.s4 1983009808
          %v817 = vunpack.c.0.s8 %v816
          %v818 = vlaneseq
          %v819 = vshrl.u32 %v818, 7
          %v820 = vsub.s32 %v817, %v819
          %v821 = vrot.slane %v813, %v820
          %v823 = vunpack.c.l.s4 1983009808
          %v824 = vunpack.c.0.s8 %v823
          %v825 = vlaneseq
          %v826 = vshrl.u32 %v825, 7
          %v827 = vsub.s32 %v824, %v826
          %v828 = vrot.slane %v814, %v827
          %v829 = vcombine.low %v805, %v821
          %v830 = vcombine.high %v805, %v821
          %v832 = vunpack.c.l.s4 1934713408
          %v833 = vunpack.c.0.s8 %v832
          %v834 = vlaneseq
          %v835 = vshrl.u32 %v834, 7
          %v836 = vsub.s32 %v833, %v835
          %v837 = vrot.slane %v829, %v836
          %v839 = vunpack.c.l.s4 1934713408
          %v840 = vunpack.c.0.s8 %v839
          %v841 = vlaneseq
          %v842 = vshrl.u32 %v841, 7
          %v843 = vsub.s32 %v840, %v842
          %v844 = vrot.slane %v830, %v843
          %v845 = vcombine.low %v812, %v828
          %v846 = vcombine.high %v812, %v828
          %v848 = vunpack.c.l.s4 1934713408
          %v849 = vunpack.c.0.s8 %v848
          %v850 = vlaneseq
          %v851 = vshrl.u32 %v850, 7
          %v852 = vsub.s32 %v849, %v851
          %v853 = vrot.slane %v845, %v852
          %v855 = vunpack.c.l.s4 1934713408
          %v856 = vunpack.c.0.s8 %v855
          %v857 = vlaneseq
          %v858 = vshrl.u32 %v857, 7
          %v859 = vsub.s32 %v856, %v858
          %v860 = vrot.slane %v846, %v859
          %v861 = vcombine.high %v837, 0.0
          %v862 = vcombine.high %v844, 0.0
          %v863 = vcombine.high %v853, 0.0
          %v864 = vcombine.high %v860, 0.0
          %v865 = vcombine.low %v837, %v844
          %v867 = vunpack.c.l.s4 1983009808
          %v868 = vunpack.c.0.s8 %v867
          %v869 = vlaneseq
          %v870 = vshrl.u32 %v869, 7
          %v871 = vsub.s32 %v868, %v870
          %v872 = vrot.slane %v865, %v871
          %v873 = vcombine.low %v861, %v862
          %v875 = vunpack.c.l.s4 1983009808
          %v876 = vunpack.c.0.s8 %v875
          %v877 = vlaneseq
          %v878 = vshrl.u32 %v877, 7
          %v879 = vsub.s32 %v876, %v878
          %v880 = vrot.slane %v873, %v879
          %v881 = vcombine.low %v853, %v860
          %v883 = vunpack.c.l.s4 1983009808
          %v884 = vunpack.c.0.s8 %v883
          %v885 = vlaneseq
          %v886 = vshrl.u32 %v885, 7
          %v887 = vsub.s32 %v884, %v886
          %v888 = vrot.slane %v881, %v887
          %v889 = vcombine.low %v863, %v864
          %v891 = vunpack.c.l.s4 1983009808
          %v892 = vunpack.c.0.s8 %v891
          %v893 = vlaneseq
          %v894 = vshrl.u32 %v893, 7
          %v895 = vsub.s32 %v892, %v894
          %v896 = vrot.slane %v889, %v895
          %v897 = vcombine.low %v872, %v880
          %v898 = vcombine.high %v872, %v880
          %v900 = vunpack.c.l.s4 1934713408
          %v901 = vunpack.c.0.s8 %v900
          %v902 = vlaneseq
          %v903 = vshrl.u32 %v902, 7
          %v904 = vsub.s32 %v901, %v903
          %v905 = vrot.slane %v897, %v904
          %v907 = vunpack.c.l.s4 1934713408
          %v908 = vunpack.c.0.s8 %v907
          %v909 = vlaneseq
          %v910 = vshrl.u32 %v909, 7
          %v911 = vsub.s32 %v908, %v910
          %v912 = vrot.slane %v898, %v911
          %v913 = vcombine.low %v888, %v896
          %v914 = vcombine.high %v888, %v896
          %v916 = vunpack.c.l.s4 1934713408
          %v917 = vunpack.c.0.s8 %v916
          %v918 = vlaneseq
          %v919 = vshrl.u32 %v918, 7
          %v920 = vsub.s32 %v917, %v919
          %v921 = vrot.slane %v913, %v920
          %v923 = vunpack.c.l.s4 1934713408
          %v924 = vunpack.c.0.s8 %v923
          %v925 = vlaneseq
          %v926 = vshrl.u32 %v925, 7
          %v927 = vsub.s32 %v924, %v926
          %v928 = vrot.slane %v914, %v927
          %v929 = vcombine.low %v905, %v921
          %v930 = vcombine.high %v905, %v921
          %v931 = vcombine.low %v912, %v928
          %v932 = vcombine.high %v912, %v928
          %vm933 = vcmask 64512
          %934 = vst.msk [vmem:[#allocation2] sm:$0xff] %vm933, %v929
          %935 = vst.msk [vmem:[#allocation2 + $0x8] sm:$0xff] %vm933, %v930
          %936 = vst.msk [vmem:[#allocation2 + $0x10] sm:$0xff] %vm933, %v931
          %937 = vst.msk [vmem:[#allocation2 + $0x18] sm:$0xff] %vm933, %v932
          %vm938 = vcmask 7168
          %939 = vst.msk [vmem:[#allocation5] sm:$0xff] %vm938, -inf
          %940 = vst.msk [vmem:[#allocation5 + $0x8] sm:$0xff] %vm938, -inf
          %941 = vst.msk [vmem:[#allocation5 + $0x10] sm:$0xff] %vm938, -inf
          %942 = vst.msk [vmem:[#allocation5 + $0x18] sm:$0xff] %vm938, -inf
          %943 = vst.msk [vmem:[#allocation6] sm:$0xff] %vm938, 0.0
          %944 = vst.msk [vmem:[#allocation6 + $0x8] sm:$0xff] %vm938, 0.0
          %945 = vst.msk [vmem:[#allocation6 + $0x10] sm:$0xff] %vm938, 0.0
          %946 = vst.msk [vmem:[#allocation6 + $0x18] sm:$0xff] %vm938, 0.0
          %947 = vst.msk [vmem:[#allocation7] sm:$0xff] %vm933, 0.0
          %948 = vst.msk [vmem:[#allocation7 + $0x8] sm:$0xff] %vm933, 0.0
          %949 = vst.msk [vmem:[#allocation7 + $0x10] sm:$0xff] %vm933, 0.0
          %950 = vst.msk [vmem:[#allocation7 + $0x18] sm:$0xff] %vm933, 0.0
        $region120: #{tpu_custom_call.1} parent=67 // pred_fallthru
          _
        %p951 = scmp.eq.s32.totalorder %s45, 0
        // Predicated region
        $region121: #{tpu_custom_call.1} parent=67 // pred_check
          %p952 = pneg %p951
        $region122: #{tpu_custom_call.1} parent=67 // pred_check_branch
          %954 = sbr.rel (%p952) target = $region124
        $region123: #{tpu_custom_call.1} parent=67 // pred_region
          %v955 = vld [vmem:[%s587] sm:$0xff]
          %v956 = vld [vmem:[%s596] sm:$0xff]
          %v957 = vld [vmem:[#allocation19] sm:$0xff]
          %v958 = vld [vmem:[#allocation19 + $0x8] sm:$0xff]
          %v959 = vld [vmem:[#allocation19 + $0x10] sm:$0xff]
          %v960 = vld [vmem:[#allocation19 + $0x18] sm:$0xff]
          %v961 = vld [vmem:[#allocation20] sm:$0x1]
          %v963 = vlaneseq
          %v964 = vshrl.u32 %v963, 7
          %v965 = vsub.s32 0, %v964
          %v966 = vrot.slane %v961, %v965
          %vm968 = vcmask 261120
          %v970 = vsel %vm968, %v955, 0
          %972 = vmatprep.subr.mxu0 0.0
          %973 = vmatpush1.msra.mxu0 %v957
          %974 = vmatprep.subr.mxu0 0.0
          %975 = vmatpush1.msra.mxu0 %v958
          %976 = vmatprep.subr.mxu0 0.0
          %977 = vmatpush1.msra.mxu0 %v959
          %978 = vmatprep.subr.mxu0 0.0
          %979 = vmatpush1.msra.mxu0 %v960
          %980 = vmatprep.subr.mxu0 0.0
          %981 = vmatpush1.msra.mxu0 0.0
          %982 = vmatprep.subr.mxu0 0.0
          %983 = vmatpush1.msra.mxu0 0.0
          %984 = vmatprep.subr.mxu0 0.0
          %985 = vmatpush1.msra.mxu0 0.0
          %986 = vmatprep.subr.mxu0 0.0
          %987 = vmatpush1.msra.mxu0 0.0
          %988 = vmatprep.subr.mxu0 0.0
          %989 = vmatpush1.msra.mxu0 0.0
          %990 = vmatprep.subr.mxu0 0.0
          %991 = vmatpush1.msra.mxu0 0.0
          %992 = vmatprep.subr.mxu0 0.0
          %993 = vmatpush1.msra.mxu0 0.0
          %994 = vmatprep.subr.mxu0 0.0
          %995 = vmatpush1.msra.mxu0 0.0
          %996 = vmatprep.subr.mxu0 0.0
          %997 = vmatpush1.msra.mxu0 0.0
          %998 = vmatprep.subr.mxu0 0.0
          %999 = vmatpush1.msra.mxu0 0.0
          %1000 = vmatprep.subr.mxu0 0.0
          %1001 = vmatpush1.msra.mxu0 0.0
          %1002 = vmatprep.subr.mxu0 0.0
          %1003 = vmatpush1.msra.mxu0 0.0
          %1004 = vmatprep.subr.mxu0 0.0
          %1005 = vmatpush1.msra.mxu0 0.0
          %1006 = vmatprep.subr.mxu0 0.0
          %1007 = vmatpush1.msra.mxu0 0.0
          %1008 = vmatprep.subr.mxu0 0.0
          %1009 = vmatpush1.msra.mxu0 0.0
          %1010 = vmatprep.subr.mxu0 0.0
          %1011 = vmatpush1.msra.mxu0 0.0
          %1012 = vmatprep.subr.mxu0 0.0
          %1013 = vmatpush1.msra.mxu0 0.0
          %1014 = vmatprep.subr.mxu0 0.0
          %1015 = vmatpush1.msra.mxu0 0.0
          %1016 = vmatprep.subr.mxu0 0.0
          %1017 = vmatpush1.msra.mxu0 0.0
          %1018 = vmatprep.subr.mxu0 0.0
          %1019 = vmatpush1.msra.mxu0 0.0
          %1020 = vmatprep.subr.mxu0 0.0
          %1021 = vmatpush1.msra.mxu0 0.0
          %1022 = vmatprep.subr.mxu0 0.0
          %1023 = vmatpush1.msra.mxu0 0.0
          %1024 = vmatprep.subr.mxu0 0.0
          %1025 = vmatpush1.msra.mxu0 0.0
          %1026 = vmatprep.subr.mxu0 0.0
          %1027 = vmatpush1.msra.mxu0 0.0
          %1028 = vmatprep.subr.mxu0 0.0
          %1029 = vmatpush1.msra.mxu0 0.0
          %1030 = vmatprep.subr.mxu0 0.0
          %1031 = vmatpush1.msra.mxu0 0.0
          %1032 = vmatprep.subr.mxu0 0.0
          %1033 = vmatpush1.msra.mxu0 0.0
          %1034 = vmatprep.subr.mxu0 0.0
          %1035 = vmatpush1.msra.mxu0 0.0
          %1036 = vmatprep.mubr.f32.mxu0 0.0
          %1037 = vmatmul.mubr.f32.gmra.mrb[0].mxu0 %v970
          %v1038 = vpop.f32.mrb[0].mxu0
          %v1039 = vadd.f32 %v966, %v1038
          %v1040 = vpop.f32.mrb[0].mxu0
          %1041 = vdwg.mxu0
          %v1042 = vld [vmem:[#allocation22] sm:$0xff]
          %v1043 = vld [vmem:[#allocation22 + $0x8] sm:$0xff]
          %v1044 = vld [vmem:[#allocation22 + $0x10] sm:$0xff]
          %v1045 = vld [vmem:[#allocation22 + $0x18] sm:$0xff]
          %v1046 = vld [vmem:[#allocation23] sm:$0x1]
          %v1048 = vlaneseq
          %v1049 = vshrl.u32 %v1048, 7
          %v1050 = vsub.s32 0, %v1049
          %v1051 = vrot.slane %v1046, %v1050
          %v1054 = vsel %vm968, %v956, 0
          %1056 = vmatprep.subr.mxu0 0.0
          %1057 = vmatpush1.msra.mxu0 %v1042
          %1058 = vmatprep.subr.mxu0 0.0
          %1059 = vmatpush1.msra.mxu0 %v1043
          %1060 = vmatprep.subr.mxu0 0.0
          %1061 = vmatpush1.msra.mxu0 %v1044
          %1062 = vmatprep.subr.mxu0 0.0
          %1063 = vmatpush1.msra.mxu0 %v1045
          %1064 = vmatprep.subr.mxu0 0.0
          %1065 = vmatpush1.msra.mxu0 0.0
          %1066 = vmatprep.subr.mxu0 0.0
          %1067 = vmatpush1.msra.mxu0 0.0
          %1068 = vmatprep.subr.mxu0 0.0
          %1069 = vmatpush1.msra.mxu0 0.0
          %1070 = vmatprep.subr.mxu0 0.0
          %1071 = vmatpush1.msra.mxu0 0.0
          %1072 = vmatprep.subr.mxu0 0.0
          %1073 = vmatpush1.msra.mxu0 0.0
          %1074 = vmatprep.subr.mxu0 0.0
          %1075 = vmatpush1.msra.mxu0 0.0
          %1076 = vmatprep.subr.mxu0 0.0
          %1077 = vmatpush1.msra.mxu0 0.0
          %1078 = vmatprep.subr.mxu0 0.0
          %1079 = vmatpush1.msra.mxu0 0.0
          %1080 = vmatprep.subr.mxu0 0.0
          %1081 = vmatpush1.msra.mxu0 0.0
          %1082 = vmatprep.subr.mxu0 0.0
          %1083 = vmatpush1.msra.mxu0 0.0
          %1084 = vmatprep.subr.mxu0 0.0
          %1085 = vmatpush1.msra.mxu0 0.0
          %1086 = vmatprep.subr.mxu0 0.0
          %1087 = vmatpush1.msra.mxu0 0.0
          %1088 = vmatprep.subr.mxu0 0.0
          %1089 = vmatpush1.msra.mxu0 0.0
          %1090 = vmatprep.subr.mxu0 0.0
          %1091 = vmatpush1.msra.mxu0 0.0
          %1092 = vmatprep.subr.mxu0 0.0
          %1093 = vmatpush1.msra.mxu0 0.0
          %1094 = vmatprep.subr.mxu0 0.0
          %1095 = vmatpush1.msra.mxu0 0.0
          %1096 = vmatprep.subr.mxu0 0.0
          %1097 = vmatpush1.msra.mxu0 0.0
          %1098 = vmatprep.subr.mxu0 0.0
          %1099 = vmatpush1.msra.mxu0 0.0
          %1100 = vmatprep.subr.mxu0 0.0
          %1101 = vmatpush1.msra.mxu0 0.0
          %1102 = vmatprep.subr.mxu0 0.0
          %1103 = vmatpush1.msra.mxu0 0.0
          %1104 = vmatprep.subr.mxu0 0.0
          %1105 = vmatpush1.msra.mxu0 0.0
          %1106 = vmatprep.subr.mxu0 0.0
          %1107 = vmatpush1.msra.mxu0 0.0
          %1108 = vmatprep.subr.mxu0 0.0
          %1109 = vmatpush1.msra.mxu0 0.0
          %1110 = vmatprep.subr.mxu0 0.0
          %1111 = vmatpush1.msra.mxu0 0.0
          %1112 = vmatprep.subr.mxu0 0.0
          %1113 = vmatpush1.msra.mxu0 0.0
          %1114 = vmatprep.subr.mxu0 0.0
          %1115 = vmatpush1.msra.mxu0 0.0
          %1116 = vmatprep.subr.mxu0 0.0
          %1117 = vmatpush1.msra.mxu0 0.0
          %1118 = vmatprep.subr.mxu0 0.0
          %1119 = vmatpush1.msra.mxu0 0.0
          %1120 = vmatprep.mubr.f32.mxu0 0.0
          %1121 = vmatmul.mubr.f32.gmra.mrb[0].mxu0 %v1054
          %v1122 = vpop.f32.mrb[0].mxu0
          %v1123 = vadd.f32 %v1051, %v1122
          %v1124 = vpop.f32.mrb[0].mxu0
          %1125 = vdwg.mxu0
          %1127 = vrot.lane.b32.xlu0 %v1039, 120
          %v1128 = vpop.permute.xlu0 %1127
          %1130 = vrot.lane.b32.xlu0 %v1039, 112
          %v1131 = vpop.permute.xlu0 %1130
          %1133 = vrot.lane.b32.xlu0 %v1039, 104
          %v1134 = vpop.permute.xlu0 %1133
          %v1136 = vcombine.low %v1039, %v1131
          %v1137 = vcombine.high %v1039, %v1131
          %v1139 = vunpack.c.l.s4 1983009808
          %v1140 = vunpack.c.0.s8 %v1139
          %v1141 = vlaneseq
          %v1142 = vshrl.u32 %v1141, 7
          %v1143 = vsub.s32 %v1140, %v1142
          %v1144 = vrot.slane %v1136, %v1143
          %v1146 = vunpack.c.l.s4 1983009808
          %v1147 = vunpack.c.0.s8 %v1146
          %v1148 = vlaneseq
          %v1149 = vshrl.u32 %v1148, 7
          %v1150 = vsub.s32 %v1147, %v1149
          %v1151 = vrot.slane %v1137, %v1150
          %v1152 = vcombine.low %v1128, %v1134
          %v1153 = vcombine.high %v1128, %v1134
          %v1155 = vunpack.c.l.s4 1983009808
          %v1156 = vunpack.c.0.s8 %v1155
          %v1157 = vlaneseq
          %v1158 = vshrl.u32 %v1157, 7
          %v1159 = vsub.s32 %v1156, %v1158
          %v1160 = vrot.slane %v1152, %v1159
          %v1162 = vunpack.c.l.s4 1983009808
          %v1163 = vunpack.c.0.s8 %v1162
          %v1164 = vlaneseq
          %v1165 = vshrl.u32 %v1164, 7
          %v1166 = vsub.s32 %v1163, %v1165
          %v1167 = vrot.slane %v1153, %v1166
          %v1168 = vcombine.low %v1144, %v1160
          %v1169 = vcombine.high %v1144, %v1160
          %v1171 = vunpack.c.l.s4 1934713408
          %v1172 = vunpack.c.0.s8 %v1171
          %v1173 = vlaneseq
          %v1174 = vshrl.u32 %v1173, 7
          %v1175 = vsub.s32 %v1172, %v1174
          %v1176 = vrot.slane %v1168, %v1175
          %v1178 = vunpack.c.l.s4 1934713408
          %v1179 = vunpack.c.0.s8 %v1178
          %v1180 = vlaneseq
          %v1181 = vshrl.u32 %v1180, 7
          %v1182 = vsub.s32 %v1179, %v1181
          %v1183 = vrot.slane %v1169, %v1182
          %v1184 = vcombine.low %v1151, %v1167
          %v1185 = vcombine.high %v1151, %v1167
          %v1187 = vunpack.c.l.s4 1934713408
          %v1188 = vunpack.c.0.s8 %v1187
          %v1189 = vlaneseq
          %v1190 = vshrl.u32 %v1189, 7
          %v1191 = vsub.s32 %v1188, %v1190
          %v1192 = vrot.slane %v1184, %v1191
          %v1194 = vunpack.c.l.s4 1934713408
          %v1195 = vunpack.c.0.s8 %v1194
          %v1196 = vlaneseq
          %v1197 = vshrl.u32 %v1196, 7
          %v1198 = vsub.s32 %v1195, %v1197
          %v1199 = vrot.slane %v1185, %v1198
          %v1200 = vcombine.high %v1176, 0.0
          %v1201 = vcombine.high %v1183, 0.0
          %v1202 = vcombine.high %v1192, 0.0
          %v1203 = vcombine.high %v1199, 0.0
          %v1204 = vcombine.low %v1176, %v1183
          %v1206 = vunpack.c.l.s4 1983009808
          %v1207 = vunpack.c.0.s8 %v1206
          %v1208 = vlaneseq
          %v1209 = vshrl.u32 %v1208, 7
          %v1210 = vsub.s32 %v1207, %v1209
          %v1211 = vrot.slane %v1204, %v1210
          %v1212 = vcombine.low %v1200, %v1201
          %v1214 = vunpack.c.l.s4 1983009808
          %v1215 = vunpack.c.0.s8 %v1214
          %v1216 = vlaneseq
          %v1217 = vshrl.u32 %v1216, 7
          %v1218 = vsub.s32 %v1215, %v1217
          %v1219 = vrot.slane %v1212, %v1218
          %v1220 = vcombine.low %v1192, %v1199
          %v1222 = vunpack.c.l.s4 1983009808
          %v1223 = vunpack.c.0.s8 %v1222
          %v1224 = vlaneseq
          %v1225 = vshrl.u32 %v1224, 7
          %v1226 = vsub.s32 %v1223, %v1225
          %v1227 = vrot.slane %v1220, %v1226
          %v1228 = vcombine.low %v1202, %v1203
          %v1230 = vunpack.c.l.s4 1983009808
          %v1231 = vunpack.c.0.s8 %v1230
          %v1232 = vlaneseq
          %v1233 = vshrl.u32 %v1232, 7
          %v1234 = vsub.s32 %v1231, %v1233
          %v1235 = vrot.slane %v1228, %v1234
          %v1236 = vcombine.low %v1211, %v1219
          %v1237 = vcombine.high %v1211, %v1219
          %v1239 = vunpack.c.l.s4 1934713408
          %v1240 = vunpack.c.0.s8 %v1239
          %v1241 = vlaneseq
          %v1242 = vshrl.u32 %v1241, 7
          %v1243 = vsub.s32 %v1240, %v1242
          %v1244 = vrot.slane %v1236, %v1243
          %v1246 = vunpack.c.l.s4 1934713408
          %v1247 = vunpack.c.0.s8 %v1246
          %v1248 = vlaneseq
          %v1249 = vshrl.u32 %v1248, 7
          %v1250 = vsub.s32 %v1247, %v1249
          %v1251 = vrot.slane %v1237, %v1250
          %v1252 = vcombine.low %v1227, %v1235
          %v1253 = vcombine.high %v1227, %v1235
          %v1255 = vunpack.c.l.s4 1934713408
          %v1256 = vunpack.c.0.s8 %v1255
          %v1257 = vlaneseq
          %v1258 = vshrl.u32 %v1257, 7
          %v1259 = vsub.s32 %v1256, %v1258
          %v1260 = vrot.slane %v1252, %v1259
          %v1262 = vunpack.c.l.s4 1934713408
          %v1263 = vunpack.c.0.s8 %v1262
          %v1264 = vlaneseq
          %v1265 = vshrl.u32 %v1264, 7
          %v1266 = vsub.s32 %v1263, %v1265
          %v1267 = vrot.slane %v1253, %v1266
          %v1268 = vcombine.low %v1244, %v1260
          %v1269 = vcombine.high %v1244, %v1260
          %v1270 = vcombine.low %v1251, %v1267
          %v1271 = vcombine.high %v1251, %v1267
          %s1272 = smul.u32 %s46, 32
          %s1273 = scalar_lea.vmem [#allocation3], %s1272
          %vm1274 = vcmask 64512
          %1275 = vst.msk [vmem:[%s1273] sm:$0xff] %vm1274, %v1268
          %1276 = vst.msk [vmem:[%s1273 + $0x8] sm:$0xff] %vm1274, %v1269
          %1277 = vst.msk [vmem:[%s1273 + $0x10] sm:$0xff] %vm1274, %v1270
          %1278 = vst.msk [vmem:[%s1273 + $0x18] sm:$0xff] %vm1274, %v1271
          %1280 = vrot.lane.b32.xlu0 %v1123, 120
          %v1281 = vpop.permute.xlu0 %1280
          %1283 = vrot.lane.b32.xlu0 %v1123, 112
          %v1284 = vpop.permute.xlu0 %1283
          %1286 = vrot.lane.b32.xlu0 %v1123, 104
          %v1287 = vpop.permute.xlu0 %1286
          %v1289 = vcombine.low %v1123, %v1284
          %v1290 = vcombine.high %v1123, %v1284
          %v1292 = vunpack.c.l.s4 1983009808
          %v1293 = vunpack.c.0.s8 %v1292
          %v1294 = vlaneseq
          %v1295 = vshrl.u32 %v1294, 7
          %v1296 = vsub.s32 %v1293, %v1295
          %v1297 = vrot.slane %v1289, %v1296
          %v1299 = vunpack.c.l.s4 1983009808
          %v1300 = vunpack.c.0.s8 %v1299
          %v1301 = vlaneseq
          %v1302 = vshrl.u32 %v1301, 7
          %v1303 = vsub.s32 %v1300, %v1302
          %v1304 = vrot.slane %v1290, %v1303
          %v1305 = vcombine.low %v1281, %v1287
          %v1306 = vcombine.high %v1281, %v1287
          %v1308 = vunpack.c.l.s4 1983009808
          %v1309 = vunpack.c.0.s8 %v1308
          %v1310 = vlaneseq
          %v1311 = vshrl.u32 %v1310, 7
          %v1312 = vsub.s32 %v1309, %v1311
          %v1313 = vrot.slane %v1305, %v1312
          %v1315 = vunpack.c.l.s4 1983009808
          %v1316 = vunpack.c.0.s8 %v1315
          %v1317 = vlaneseq
          %v1318 = vshrl.u32 %v1317, 7
          %v1319 = vsub.s32 %v1316, %v1318
          %v1320 = vrot.slane %v1306, %v1319
          %v1321 = vcombine.low %v1297, %v1313
          %v1322 = vcombine.high %v1297, %v1313
          %v1324 = vunpack.c.l.s4 1934713408
          %v1325 = vunpack.c.0.s8 %v1324
          %v1326 = vlaneseq
          %v1327 = vshrl.u32 %v1326, 7
          %v1328 = vsub.s32 %v1325, %v1327
          %v1329 = vrot.slane %v1321, %v1328
          %v1331 = vunpack.c.l.s4 1934713408
          %v1332 = vunpack.c.0.s8 %v1331
          %v1333 = vlaneseq
          %v1334 = vshrl.u32 %v1333, 7
          %v1335 = vsub.s32 %v1332, %v1334
          %v1336 = vrot.slane %v1322, %v1335
          %v1337 = vcombine.low %v1304, %v1320
          %v1338 = vcombine.high %v1304, %v1320
          %v1340 = vunpack.c.l.s4 1934713408
          %v1341 = vunpack.c.0.s8 %v1340
          %v1342 = vlaneseq
          %v1343 = vshrl.u32 %v1342, 7
          %v1344 = vsub.s32 %v1341, %v1343
          %v1345 = vrot.slane %v1337, %v1344
          %v1347 = vunpack.c.l.s4 1934713408
          %v1348 = vunpack.c.0.s8 %v1347
          %v1349 = vlaneseq
          %v1350 = vshrl.u32 %v1349, 7
          %v1351 = vsub.s32 %v1348, %v1350
          %v1352 = vrot.slane %v1338, %v1351
          %v1353 = vcombine.high %v1329, 0.0
          %v1354 = vcombine.high %v1336, 0.0
          %v1355 = vcombine.high %v1345, 0.0
          %v1356 = vcombine.high %v1352, 0.0
          %v1357 = vcombine.low %v1329, %v1336
          %v1359 = vunpack.c.l.s4 1983009808
          %v1360 = vunpack.c.0.s8 %v1359
          %v1361 = vlaneseq
          %v1362 = vshrl.u32 %v1361, 7
          %v1363 = vsub.s32 %v1360, %v1362
          %v1364 = vrot.slane %v1357, %v1363
          %v1365 = vcombine.low %v1353, %v1354
          %v1367 = vunpack.c.l.s4 1983009808
          %v1368 = vunpack.c.0.s8 %v1367
          %v1369 = vlaneseq
          %v1370 = vshrl.u32 %v1369, 7
          %v1371 = vsub.s32 %v1368, %v1370
          %v1372 = vrot.slane %v1365, %v1371
          %v1373 = vcombine.low %v1345, %v1352
          %v1375 = vunpack.c.l.s4 1983009808
          %v1376 = vunpack.c.0.s8 %v1375
          %v1377 = vlaneseq
          %v1378 = vshrl.u32 %v1377, 7
          %v1379 = vsub.s32 %v1376, %v1378
          %v1380 = vrot.slane %v1373, %v1379
          %v1381 = vcombine.low %v1355, %v1356
          %v1383 = vunpack.c.l.s4 1983009808
          %v1384 = vunpack.c.0.s8 %v1383
          %v1385 = vlaneseq
          %v1386 = vshrl.u32 %v1385, 7
          %v1387 = vsub.s32 %v1384, %v1386
          %v1388 = vrot.slane %v1381, %v1387
          %v1389 = vcombine.low %v1364, %v1372
          %v1390 = vcombine.high %v1364, %v1372
          %v1392 = vunpack.c.l.s4 1934713408
          %v1393 = vunpack.c.0.s8 %v1392
          %v1394 = vlaneseq
          %v1395 = vshrl.u32 %v1394, 7
          %v1396 = vsub.s32 %v1393, %v1395
          %v1397 = vrot.slane %v1389, %v1396
          %v1399 = vunpack.c.l.s4 1934713408
          %v1400 = vunpack.c.0.s8 %v1399
          %v1401 = vlaneseq
          %v1402 = vshrl.u32 %v1401, 7
          %v1403 = vsub.s32 %v1400, %v1402
          %v1404 = vrot.slane %v1390, %v1403
          %v1405 = vcombine.low %v1380, %v1388
          %v1406 = vcombine.high %v1380, %v1388
          %v1408 = vunpack.c.l.s4 1934713408
          %v1409 = vunpack.c.0.s8 %v1408
          %v1410 = vlaneseq
          %v1411 = vshrl.u32 %v1410, 7
          %v1412 = vsub.s32 %v1409, %v1411
          %v1413 = vrot.slane %v1405, %v1412
          %v1415 = vunpack.c.l.s4 1934713408
          %v1416 = vunpack.c.0.s8 %v1415
          %v1417 = vlaneseq
          %v1418 = vshrl.u32 %v1417, 7
          %v1419 = vsub.s32 %v1416, %v1418
          %v1420 = vrot.slane %v1406, %v1419
          %v1421 = vcombine.low %v1397, %v1413
          %v1422 = vcombine.high %v1397, %v1413
          %v1423 = vcombine.low %v1404, %v1420
          %v1424 = vcombine.high %v1404, %v1420
          %s1425 = scalar_lea.vmem [#allocation4], %s1272
          %1426 = vst.msk [vmem:[%s1425] sm:$0xff] %vm1274, %v1421
          %1427 = vst.msk [vmem:[%s1425 + $0x8] sm:$0xff] %vm1274, %v1422
          %1428 = vst.msk [vmem:[%s1425 + $0x10] sm:$0xff] %vm1274, %v1423
          %1429 = vst.msk [vmem:[%s1425 + $0x18] sm:$0xff] %vm1274, %v1424
        $region124: #{tpu_custom_call.1} parent=67 // pred_fallthru
          _
        %v1430 = vld [vmem:[#allocation2] sm:$0xff]
        %v1431 = vld [vmem:[#allocation2 + $0x8] sm:$0xff]
        %v1432 = vld [vmem:[#allocation2 + $0x10] sm:$0xff]
        %v1433 = vld [vmem:[#allocation2 + $0x18] sm:$0xff]
        %s1434 = smul.u32 %s46, 32
        %s1435 = scalar_lea.vmem [#allocation3], %s1434
        %v1436 = vld [vmem:[%s1435] sm:$0xff]
        %v1437 = vld [vmem:[%s1435 + $0x8] sm:$0xff]
        %v1438 = vld [vmem:[%s1435 + $0x10] sm:$0xff]
        %v1439 = vld [vmem:[%s1435 + $0x18] sm:$0xff]
        %s1440 = scalar_lea.vmem [#allocation4], %s1434
        %v1441 = vld [vmem:[%s1440] sm:$0xff]
        %v1442 = vld [vmem:[%s1440 + $0x8] sm:$0xff]
        %v1443 = vld [vmem:[%s1440 + $0x10] sm:$0xff]
        %v1444 = vld [vmem:[%s1440 + $0x18] sm:$0xff]
        %vm1445 = vcmask 64512
        %v1447 = vsel %vm1445, %v1430, 0
        %v1450 = vsel %vm1445, %v1436, 0
        %1452 = vmatprep.subr.mxu0 0.0
        %1453 = vmatpush1.xpose.msra.mxu0 %v1450
        %1454 = vmatprep.subr.mxu0 0.0
        %1455 = vmatpush1.xpose.msra.mxu0 0.0
        %1456 = vmatprep.subr.mxu0 0.0
        %1457 = vmatpush1.xpose.msra.mxu0 0.0
        %1458 = vmatprep.subr.mxu0 0.0
        %1459 = vmatpush1.xpose.msra.mxu0 0.0
        %1460 = vmatprep.subr.mxu0 0.0
        %1461 = vmatpush1.xpose.msra.mxu0 0.0
        %1462 = vmatprep.subr.mxu0 0.0
        %1463 = vmatpush1.xpose.msra.mxu0 0.0
        %1464 = vmatprep.subr.mxu0 0.0
        %1465 = vmatpush1.xpose.msra.mxu0 0.0
        %1466 = vmatprep.subr.mxu0 0.0
        %1467 = vmatpush1.xpose.msra.mxu0 0.0
        %1468 = vmatprep.subr.mxu0 0.0
        %1469 = vmatpush1.xpose.msra.mxu0 0.0
        %1470 = vmatprep.subr.mxu0 0.0
        %1471 = vmatpush1.xpose.msra.mxu0 0.0
        %1472 = vmatprep.subr.mxu0 0.0
        %1473 = vmatpush1.xpose.msra.mxu0 0.0
        %1474 = vmatprep.subr.mxu0 0.0
        %1475 = vmatpush1.xpose.msra.mxu0 0.0
        %1476 = vmatprep.subr.mxu0 0.0
        %1477 = vmatpush1.xpose.msra.mxu0 0.0
        %1478 = vmatprep.subr.mxu0 0.0
        %1479 = vmatpush1.xpose.msra.mxu0 0.0
        %1480 = vmatprep.subr.mxu0 0.0
        %1481 = vmatpush1.xpose.msra.mxu0 0.0
        %1482 = vmatprep.subr.mxu0 0.0
        %1483 = vmatpush1.xpose.msra.mxu0 0.0
        %1484 = vmatprep.subr.mxu0 0.0
        %1485 = vmatpush1.xpose.msra.mxu0 0.0
        %1486 = vmatprep.subr.mxu0 0.0
        %1487 = vmatpush1.xpose.msra.mxu0 0.0
        %1488 = vmatprep.subr.mxu0 0.0
        %1489 = vmatpush1.xpose.msra.mxu0 0.0
        %1490 = vmatprep.subr.mxu0 0.0
        %1491 = vmatpush1.xpose.msra.mxu0 0.0
        %1492 = vmatprep.subr.mxu0 0.0
        %1493 = vmatpush1.xpose.msra.mxu0 0.0
        %1494 = vmatprep.subr.mxu0 0.0
        %1495 = vmatpush1.xpose.msra.mxu0 0.0
        %1496 = vmatprep.subr.mxu0 0.0
        %1497 = vmatpush1.xpose.msra.mxu0 0.0
        %1498 = vmatprep.subr.mxu0 0.0
        %1499 = vmatpush1.xpose.msra.mxu0 0.0
        %1500 = vmatprep.subr.mxu0 0.0
        %1501 = vmatpush1.xpose.msra.mxu0 0.0
        %1502 = vmatprep.subr.mxu0 0.0
        %1503 = vmatpush1.xpose.msra.mxu0 0.0
        %1504 = vmatprep.subr.mxu0 0.0
        %1505 = vmatpush1.xpose.msra.mxu0 0.0
        %1506 = vmatprep.subr.mxu0 0.0
        %1507 = vmatpush1.xpose.msra.mxu0 0.0
        %1508 = vmatprep.subr.mxu0 0.0
        %1509 = vmatpush1.xpose.msra.mxu0 0.0
        %1510 = vmatprep.subr.mxu0 0.0
        %1511 = vmatpush1.xpose.msra.mxu0 0.0
        %1512 = vmatprep.subr.mxu0 0.0
        %1513 = vmatpush1.xpose.msra.mxu0 0.0
        %1514 = vmatprep.subr.mxu0 0.0
        %1515 = vmatpush1.xpose.msra.mxu0 0.0
        %1516 = vmatprep.mubr.f32.mxu0 0.0
        %1517 = vmatmul.mubr.f32.gmra.mrb[0].mxu0 %v1447
        %v1518 = vpop.f32.mrb[0].mxu0
        %v1519 = vadd.f32 0.0, %v1518
        %v1520 = vpop.f32.mrb[0].mxu0
        %1521 = vdwg.mxu0
        %v1523 = vsel %vm1445, %v1431, 0
        %v1526 = vsel %vm1445, %v1437, 0
        %1528 = vmatprep.subr.mxu0 0.0
        %1529 = vmatpush1.xpose.msra.mxu0 %v1526
        %1530 = vmatprep.subr.mxu0 0.0
        %1531 = vmatpush1.xpose.msra.mxu0 0.0
        %1532 = vmatprep.subr.mxu0 0.0
        %1533 = vmatpush1.xpose.msra.mxu0 0.0
        %1534 = vmatprep.subr.mxu0 0.0
        %1535 = vmatpush1.xpose.msra.mxu0 0.0
        %1536 = vmatprep.subr.mxu0 0.0
        %1537 = vmatpush1.xpose.msra.mxu0 0.0
        %1538 = vmatprep.subr.mxu0 0.0
        %1539 = vmatpush1.xpose.msra.mxu0 0.0
        %1540 = vmatprep.subr.mxu0 0.0
        %1541 = vmatpush1.xpose.msra.mxu0 0.0
        %1542 = vmatprep.subr.mxu0 0.0
        %1543 = vmatpush1.xpose.msra.mxu0 0.0
        %1544 = vmatprep.subr.mxu0 0.0
        %1545 = vmatpush1.xpose.msra.mxu0 0.0
        %1546 = vmatprep.subr.mxu0 0.0
        %1547 = vmatpush1.xpose.msra.mxu0 0.0
        %1548 = vmatprep.subr.mxu0 0.0
        %1549 = vmatpush1.xpose.msra.mxu0 0.0
        %1550 = vmatprep.subr.mxu0 0.0
        %1551 = vmatpush1.xpose.msra.mxu0 0.0
        %1552 = vmatprep.subr.mxu0 0.0
        %1553 = vmatpush1.xpose.msra.mxu0 0.0
        %1554 = vmatprep.subr.mxu0 0.0
        %1555 = vmatpush1.xpose.msra.mxu0 0.0
        %1556 = vmatprep.subr.mxu0 0.0
        %1557 = vmatpush1.xpose.msra.mxu0 0.0
        %1558 = vmatprep.subr.mxu0 0.0
        %1559 = vmatpush1.xpose.msra.mxu0 0.0
        %1560 = vmatprep.subr.mxu0 0.0
        %1561 = vmatpush1.xpose.msra.mxu0 0.0
        %1562 = vmatprep.subr.mxu0 0.0
        %1563 = vmatpush1.xpose.msra.mxu0 0.0
        %1564 = vmatprep.subr.mxu0 0.0
        %1565 = vmatpush1.xpose.msra.mxu0 0.0
        %1566 = vmatprep.subr.mxu0 0.0
        %1567 = vmatpush1.xpose.msra.mxu0 0.0
        %1568 = vmatprep.subr.mxu0 0.0
        %1569 = vmatpush1.xpose.msra.mxu0 0.0
        %1570 = vmatprep.subr.mxu0 0.0
        %1571 = vmatpush1.xpose.msra.mxu0 0.0
        %1572 = vmatprep.subr.mxu0 0.0
        %1573 = vmatpush1.xpose.msra.mxu0 0.0
        %1574 = vmatprep.subr.mxu0 0.0
        %1575 = vmatpush1.xpose.msra.mxu0 0.0
        %1576 = vmatprep.subr.mxu0 0.0
        %1577 = vmatpush1.xpose.msra.mxu0 0.0
        %1578 = vmatprep.subr.mxu0 0.0
        %1579 = vmatpush1.xpose.msra.mxu0 0.0
        %1580 = vmatprep.subr.mxu0 0.0
        %1581 = vmatpush1.xpose.msra.mxu0 0.0
        %1582 = vmatprep.subr.mxu0 0.0
        %1583 = vmatpush1.xpose.msra.mxu0 0.0
        %1584 = vmatprep.subr.mxu0 0.0
        %1585 = vmatpush1.xpose.msra.mxu0 0.0
        %1586 = vmatprep.subr.mxu0 0.0
        %1587 = vmatpush1.xpose.msra.mxu0 0.0
        %1588 = vmatprep.subr.mxu0 0.0
        %1589 = vmatpush1.xpose.msra.mxu0 0.0
        %1590 = vmatprep.subr.mxu0 0.0
        %1591 = vmatpush1.xpose.msra.mxu0 0.0
        %1592 = vmatprep.mubr.f32.mxu0 0.0
        %1593 = vmatmul.mubr.f32.gmra.mrb[0].mxu0 %v1523
        %v1594 = vpop.f32.mrb[0].mxu0
        %v1595 = vadd.f32 0.0, %v1594
        %v1596 = vpop.f32.mrb[0].mxu0
        %1597 = vdwg.mxu0
        %v1599 = vsel %vm1445, %v1432, 0
        %v1602 = vsel %vm1445, %v1438, 0
        %1604 = vmatprep.subr.mxu0 0.0
        %1605 = vmatpush1.xpose.msra.mxu0 %v1602
        %1606 = vmatprep.subr.mxu0 0.0
        %1607 = vmatpush1.xpose.msra.mxu0 0.0
        %1608 = vmatprep.subr.mxu0 0.0
        %1609 = vmatpush1.xpose.msra.mxu0 0.0
        %1610 = vmatprep.subr.mxu0 0.0
        %1611 = vmatpush1.xpose.msra.mxu0 0.0
        %1612 = vmatprep.subr.mxu0 0.0
        %1613 = vmatpush1.xpose.msra.mxu0 0.0
        %1614 = vmatprep.subr.mxu0 0.0
        %1615 = vmatpush1.xpose.msra.mxu0 0.0
        %1616 = vmatprep.subr.mxu0 0.0
        %1617 = vmatpush1.xpose.msra.mxu0 0.0
        %1618 = vmatprep.subr.mxu0 0.0
        %1619 = vmatpush1.xpose.msra.mxu0 0.0
        %1620 = vmatprep.subr.mxu0 0.0
        %1621 = vmatpush1.xpose.msra.mxu0 0.0
        %1622 = vmatprep.subr.mxu0 0.0
        %1623 = vmatpush1.xpose.msra.mxu0 0.0
        %1624 = vmatprep.subr.mxu0 0.0
        %1625 = vmatpush1.xpose.msra.mxu0 0.0
        %1626 = vmatprep.subr.mxu0 0.0
        %1627 = vmatpush1.xpose.msra.mxu0 0.0
        %1628 = vmatprep.subr.mxu0 0.0
        %1629 = vmatpush1.xpose.msra.mxu0 0.0
        %1630 = vmatprep.subr.mxu0 0.0
        %1631 = vmatpush1.xpose.msra.mxu0 0.0
        %1632 = vmatprep.subr.mxu0 0.0
        %1633 = vmatpush1.xpose.msra.mxu0 0.0
        %1634 = vmatprep.subr.mxu0 0.0
        %1635 = vmatpush1.xpose.msra.mxu0 0.0
        %1636 = vmatprep.subr.mxu0 0.0
        %1637 = vmatpush1.xpose.msra.mxu0 0.0
        %1638 = vmatprep.subr.mxu0 0.0
        %1639 = vmatpush1.xpose.msra.mxu0 0.0
        %1640 = vmatprep.subr.mxu0 0.0
        %1641 = vmatpush1.xpose.msra.mxu0 0.0
        %1642 = vmatprep.subr.mxu0 0.0
        %1643 = vmatpush1.xpose.msra.mxu0 0.0
        %1644 = vmatprep.subr.mxu0 0.0
        %1645 = vmatpush1.xpose.msra.mxu0 0.0
        %1646 = vmatprep.subr.mxu0 0.0
        %1647 = vmatpush1.xpose.msra.mxu0 0.0
        %1648 = vmatprep.subr.mxu0 0.0
        %1649 = vmatpush1.xpose.msra.mxu0 0.0
        %1650 = vmatprep.subr.mxu0 0.0
        %1651 = vmatpush1.xpose.msra.mxu0 0.0
        %1652 = vmatprep.subr.mxu0 0.0
        %1653 = vmatpush1.xpose.msra.mxu0 0.0
        %1654 = vmatprep.subr.mxu0 0.0
        %1655 = vmatpush1.xpose.msra.mxu0 0.0
        %1656 = vmatprep.subr.mxu0 0.0
        %1657 = vmatpush1.xpose.msra.mxu0 0.0
        %1658 = vmatprep.subr.mxu0 0.0
        %1659 = vmatpush1.xpose.msra.mxu0 0.0
        %1660 = vmatprep.subr.mxu0 0.0
        %1661 = vmatpush1.xpose.msra.mxu0 0.0
        %1662 = vmatprep.subr.mxu0 0.0
        %1663 = vmatpush1.xpose.msra.mxu0 0.0
        %1664 = vmatprep.subr.mxu0 0.0
        %1665 = vmatpush1.xpose.msra.mxu0 0.0
        %1666 = vmatprep.subr.mxu0 0.0
        %1667 = vmatpush1.xpose.msra.mxu0 0.0
        %1668 = vmatprep.mubr.f32.mxu0 0.0
        %1669 = vmatmul.mubr.f32.gmra.mrb[0].mxu0 %v1599
        %v1670 = vpop.f32.mrb[0].mxu0
        %v1671 = vadd.f32 0.0, %v1670
        %v1672 = vpop.f32.mrb[0].mxu0
        %1673 = vdwg.mxu0
        %v1675 = vsel %vm1445, %v1433, 0
        %v1678 = vsel %vm1445, %v1439, 0
        %1680 = vmatprep.subr.mxu0 0.0
        %1681 = vmatpush1.xpose.msra.mxu0 %v1678
        %1682 = vmatprep.subr.mxu0 0.0
        %1683 = vmatpush1.xpose.msra.mxu0 0.0
        %1684 = vmatprep.subr.mxu0 0.0
        %1685 = vmatpush1.xpose.msra.mxu0 0.0
        %1686 = vmatprep.subr.mxu0 0.0
        %1687 = vmatpush1.xpose.msra.mxu0 0.0
        %1688 = vmatprep.subr.mxu0 0.0
        %1689 = vmatpush1.xpose.msra.mxu0 0.0
        %1690 = vmatprep.subr.mxu0 0.0
        %1691 = vmatpush1.xpose.msra.mxu0 0.0
        %1692 = vmatprep.subr.mxu0 0.0
        %1693 = vmatpush1.xpose.msra.mxu0 0.0
        %1694 = vmatprep.subr.mxu0 0.0
        %1695 = vmatpush1.xpose.msra.mxu0 0.0
        %1696 = vmatprep.subr.mxu0 0.0
        %1697 = vmatpush1.xpose.msra.mxu0 0.0
        %1698 = vmatprep.subr.mxu0 0.0
        %1699 = vmatpush1.xpose.msra.mxu0 0.0
        %1700 = vmatprep.subr.mxu0 0.0
        %1701 = vmatpush1.xpose.msra.mxu0 0.0
        %1702 = vmatprep.subr.mxu0 0.0
        %1703 = vmatpush1.xpose.msra.mxu0 0.0
        %1704 = vmatprep.subr.mxu0 0.0
        %1705 = vmatpush1.xpose.msra.mxu0 0.0
        %1706 = vmatprep.subr.mxu0 0.0
        %1707 = vmatpush1.xpose.msra.mxu0 0.0
        %1708 = vmatprep.subr.mxu0 0.0
        %1709 = vmatpush1.xpose.msra.mxu0 0.0
        %1710 = vmatprep.subr.mxu0 0.0
        %1711 = vmatpush1.xpose.msra.mxu0 0.0
        %1712 = vmatprep.subr.mxu0 0.0
        %1713 = vmatpush1.xpose.msra.mxu0 0.0
        %1714 = vmatprep.subr.mxu0 0.0
        %1715 = vmatpush1.xpose.msra.mxu0 0.0
        %1716 = vmatprep.subr.mxu0 0.0
        %1717 = vmatpush1.xpose.msra.mxu0 0.0
        %1718 = vmatprep.subr.mxu0 0.0
        %1719 = vmatpush1.xpose.msra.mxu0 0.0
        %1720 = vmatprep.subr.mxu0 0.0
        %1721 = vmatpush1.xpose.msra.mxu0 0.0
        %1722 = vmatprep.subr.mxu0 0.0
        %1723 = vmatpush1.xpose.msra.mxu0 0.0
        %1724 = vmatprep.subr.mxu0 0.0
        %1725 = vmatpush1.xpose.msra.mxu0 0.0
        %1726 = vmatprep.subr.mxu0 0.0
        %1727 = vmatpush1.xpose.msra.mxu0 0.0
        %1728 = vmatprep.subr.mxu0 0.0
        %1729 = vmatpush1.xpose.msra.mxu0 0.0
        %1730 = vmatprep.subr.mxu0 0.0
        %1731 = vmatpush1.xpose.msra.mxu0 0.0
        %1732 = vmatprep.subr.mxu0 0.0
        %1733 = vmatpush1.xpose.msra.mxu0 0.0
        %1734 = vmatprep.subr.mxu0 0.0
        %1735 = vmatpush1.xpose.msra.mxu0 0.0
        %1736 = vmatprep.subr.mxu0 0.0
        %1737 = vmatpush1.xpose.msra.mxu0 0.0
        %1738 = vmatprep.subr.mxu0 0.0
        %1739 = vmatpush1.xpose.msra.mxu0 0.0
        %1740 = vmatprep.subr.mxu0 0.0
        %1741 = vmatpush1.xpose.msra.mxu0 0.0
        %1742 = vmatprep.subr.mxu0 0.0
        %1743 = vmatpush1.xpose.msra.mxu0 0.0
        %1744 = vmatprep.mubr.f32.mxu0 0.0
        %1745 = vmatmul.mubr.f32.gmra.mrb[0].mxu0 %v1675
        %v1746 = vpop.f32.mrb[0].mxu0
        %v1747 = vadd.f32 0.0, %v1746
        %v1748 = vpop.f32.mrb[0].mxu0
        %1749 = vdwg.mxu0
        %v1750 = vld [vmem:[%s604] sm:$0x1]
        %vm1751 = vnez %v1750
        %v1752 = vsel %vm1751, 16843009, 0
        %v1753 = vunpack.c.0.s8 %v1752
        %vm1754 = vcmp.ne.s32.totalorder %v1753, 0
        %v1755 = vsel %vm1754, 1, 0
        %v1756 = vlaneseq
        %v1757 = vshrl.u32 %v1756, 7
        %v1758 = vsub.s32 0, %v1757
        %v1759 = vrot.slane %v1755, %v1758
        %vm1760 = vcmp.eq.s32.totalorder %v1759, 1
        %v1761 = vsel %vm1760, %v1519, -1e+09
        %v1762 = vsel %vm1760, %v1595, -1e+09
        %v1763 = vsel %vm1760, %v1671, -1e+09
        %v1764 = vsel %vm1760, %v1747, -1e+09
        %v1765 = vld [vmem:[#allocation5] sm:$0xff]
        %v1766 = vld [vmem:[#allocation5 + $0x8] sm:$0xff]
        %v1767 = vld [vmem:[#allocation5 + $0x10] sm:$0xff]
        %v1768 = vld [vmem:[#allocation5 + $0x18] sm:$0xff]
        %v1769 = vsel %vm1445, %v1761, -inf
        %1770 = vmax.xlane.f32.xlu0 %v1769
        %v1771 = vpop.xlane.xlu0 %1770
        %v1772 = vsel %vm1445, %v1762, -inf
        %1773 = vmax.xlane.f32.xlu0 %v1772
        %v1774 = vpop.xlane.xlu0 %1773
        %v1775 = vsel %vm1445, %v1763, -inf
        %1776 = vmax.xlane.f32.xlu0 %v1775
        %v1777 = vpop.xlane.xlu0 %1776
        %v1778 = vsel %vm1445, %v1764, -inf
        %1779 = vmax.xlane.f32.xlu0 %v1778
        %v1780 = vpop.xlane.xlu0 %1779
        %v1781 = vmax.f32 %v1765, %v1771
        %v1782 = vmax.f32 %v1766, %v1774
        %v1783 = vmax.f32 %v1767, %v1777
        %v1784 = vmax.f32 %v1768, %v1780
        %v1785 = vsub.f32 %v1765, %v1781
        %v1786 = vsub.f32 %v1766, %v1782
        %v1787 = vsub.f32 %v1767, %v1783
        %v1788 = vsub.f32 %v1768, %v1784
        %v1789 = vmul.f32 %v1785, 1.442695
        %v1790 = vpow.pop %v1789
        %v1791 = vmul.f32 %v1786, 1.442695
        %v1792 = vpow.pop %v1791
        %v1793 = vmul.f32 %v1787, 1.442695
        %v1794 = vpow.pop %v1793
        %v1795 = vmul.f32 %v1788, 1.442695
        %v1796 = vpow.pop %v1795
        %1798 = vset.pattern.permute.xlu0 0
        %1799 = vperm.xlu0 %1798, %v1781
        %v1800 = vpop.permute.xlu0 %1799
        %1803 = vset.pattern.permute.xlu0 0
        %1804 = vperm.xlu0 %1803, %v1782
        %v1805 = vpop.permute.xlu0 %1804
        %1808 = vset.pattern.permute.xlu0 0
        %1809 = vperm.xlu0 %1808, %v1783
        %v1810 = vpop.permute.xlu0 %1809
        %1813 = vset.pattern.permute.xlu0 0
        %1814 = vperm.xlu0 %1813, %v1784
        %v1815 = vpop.permute.xlu0 %1814
        %v1817 = vsub.f32 %v1761, %v1800
        %v1818 = vsub.f32 %v1762, %v1805
        %v1819 = vsub.f32 %v1763, %v1810
        %v1820 = vsub.f32 %v1764, %v1815
        %v1821 = vmul.f32 %v1817, 1.442695
        %v1822 = vpow.pop %v1821
        %v1823 = vmul.f32 %v1818, 1.442695
        %v1824 = vpow.pop %v1823
        %v1825 = vmul.f32 %v1819, 1.442695
        %v1826 = vpow.pop %v1825
        %v1827 = vmul.f32 %v1820, 1.442695
        %v1828 = vpow.pop %v1827
        %v1829 = vld [vmem:[#allocation6] sm:$0xff]
        %v1830 = vld [vmem:[#allocation6 + $0x8] sm:$0xff]
        %v1831 = vld [vmem:[#allocation6 + $0x10] sm:$0xff]
        %v1832 = vld [vmem:[#allocation6 + $0x18] sm:$0xff]
        %v1833 = vmul.f32 %v1790, %v1829
        %v1834 = vmul.f32 %v1792, %v1830
        %v1835 = vmul.f32 %v1794, %v1831
        %v1836 = vmul.f32 %v1796, %v1832
        %v1837 = vsel %vm1445, %v1822, 0.0
        %1838 = vadd.xlane.f32.xlu0 %v1837
        %v1839 = vpop.xlane.xlu0 %1838
        %v1840 = vsel %vm1445, %v1824, 0.0
        %1841 = vadd.xlane.f32.xlu0 %v1840
        %v1842 = vpop.xlane.xlu0 %1841
        %v1843 = vsel %vm1445, %v1826, 0.0
        %1844 = vadd.xlane.f32.xlu0 %v1843
        %v1845 = vpop.xlane.xlu0 %1844
        %v1846 = vsel %vm1445, %v1828, 0.0
        %1847 = vadd.xlane.f32.xlu0 %v1846
        %v1848 = vpop.xlane.xlu0 %1847
        %v1849 = vadd.f32 %v1833, %v1839
        %v1850 = vadd.f32 %v1834, %v1842
        %v1851 = vadd.f32 %v1835, %v1845
        %v1852 = vadd.f32 %v1836, %v1848
        %v1854 = vsel %vm1445, %v1822, 0
        %1856 = vmatprep.subr.mxu0 0.0
        %1857 = vmatpush1.msra.mxu0 %v1441
        %1858 = vmatprep.subr.mxu0 0.0
        %1859 = vmatpush1.msra.mxu0 0.0
        %1860 = vmatprep.subr.mxu0 0.0
        %1861 = vmatpush1.msra.mxu0 0.0
        %1862 = vmatprep.subr.mxu0 0.0
        %1863 = vmatpush1.msra.mxu0 0.0
        %1864 = vmatprep.subr.mxu0 0.0
        %1865 = vmatpush1.msra.mxu0 0.0
        %1866 = vmatprep.subr.mxu0 0.0
        %1867 = vmatpush1.msra.mxu0 0.0
        %1868 = vmatprep.subr.mxu0 0.0
        %1869 = vmatpush1.msra.mxu0 0.0
        %1870 = vmatprep.subr.mxu0 0.0
        %1871 = vmatpush1.msra.mxu0 0.0
        %1872 = vmatprep.subr.mxu0 0.0
        %1873 = vmatpush1.msra.mxu0 0.0
        %1874 = vmatprep.subr.mxu0 0.0
        %1875 = vmatpush1.msra.mxu0 0.0
        %1876 = vmatprep.subr.mxu0 0.0
        %1877 = vmatpush1.msra.mxu0 0.0
        %1878 = vmatprep.subr.mxu0 0.0
        %1879 = vmatpush1.msra.mxu0 0.0
        %1880 = vmatprep.subr.mxu0 0.0
        %1881 = vmatpush1.msra.mxu0 0.0
        %1882 = vmatprep.subr.mxu0 0.0
        %1883 = vmatpush1.msra.mxu0 0.0
        %1884 = vmatprep.subr.mxu0 0.0
        %1885 = vmatpush1.msra.mxu0 0.0
        %1886 = vmatprep.subr.mxu0 0.0
        %1887 = vmatpush1.msra.mxu0 0.0
        %1888 = vmatprep.subr.mxu0 0.0
        %1889 = vmatpush1.msra.mxu0 0.0
        %1890 = vmatprep.subr.mxu0 0.0
        %1891 = vmatpush1.msra.mxu0 0.0
        %1892 = vmatprep.subr.mxu0 0.0
        %1893 = vmatpush1.msra.mxu0 0.0
        %1894 = vmatprep.subr.mxu0 0.0
        %1895 = vmatpush1.msra.mxu0 0.0
        %1896 = vmatprep.subr.mxu0 0.0
        %1897 = vmatpush1.msra.mxu0 0.0
        %1898 = vmatprep.subr.mxu0 0.0
        %1899 = vmatpush1.msra.mxu0 0.0
        %1900 = vmatprep.subr.mxu0 0.0
        %1901 = vmatpush1.msra.mxu0 0.0
        %1902 = vmatprep.subr.mxu0 0.0
        %1903 = vmatpush1.msra.mxu0 0.0
        %1904 = vmatprep.subr.mxu0 0.0
        %1905 = vmatpush1.msra.mxu0 0.0
        %1906 = vmatprep.subr.mxu0 0.0
        %1907 = vmatpush1.msra.mxu0 0.0
        %1908 = vmatprep.subr.mxu0 0.0
        %1909 = vmatpush1.msra.mxu0 0.0
        %1910 = vmatprep.subr.mxu0 0.0
        %1911 = vmatpush1.msra.mxu0 0.0
        %1912 = vmatprep.subr.mxu0 0.0
        %1913 = vmatpush1.msra.mxu0 0.0
        %1914 = vmatprep.subr.mxu0 0.0
        %1915 = vmatpush1.msra.mxu0 0.0
        %1916 = vmatprep.subr.mxu0 0.0
        %1917 = vmatpush1.msra.mxu0 0.0
        %1918 = vmatprep.subr.mxu0 0.0
        %1919 = vmatpush1.msra.mxu0 0.0
        %1920 = vmatprep.mubr.f32.mxu0 0.0
        %1921 = vmatmul.mubr.f32.gmra.mrb[0].mxu0 %v1854
        %v1922 = vpop.f32.mrb[0].mxu0
        %v1923 = vadd.f32 0.0, %v1922
        %v1924 = vpop.f32.mrb[0].mxu0
        %1925 = vdwg.mxu0
        %v1927 = vsel %vm1445, %v1824, 0
        %1929 = vmatprep.subr.mxu0 0.0
        %1930 = vmatpush1.msra.mxu0 %v1442
        %1931 = vmatprep.subr.mxu0 0.0
        %1932 = vmatpush1.msra.mxu0 0.0
        %1933 = vmatprep.subr.mxu0 0.0
        %1934 = vmatpush1.msra.mxu0 0.0
        %1935 = vmatprep.subr.mxu0 0.0
        %1936 = vmatpush1.msra.mxu0 0.0
        %1937 = vmatprep.subr.mxu0 0.0
        %1938 = vmatpush1.msra.mxu0 0.0
        %1939 = vmatprep.subr.mxu0 0.0
        %1940 = vmatpush1.msra.mxu0 0.0
        %1941 = vmatprep.subr.mxu0 0.0
        %1942 = vmatpush1.msra.mxu0 0.0
        %1943 = vmatprep.subr.mxu0 0.0
        %1944 = vmatpush1.msra.mxu0 0.0
        %1945 = vmatprep.subr.mxu0 0.0
        %1946 = vmatpush1.msra.mxu0 0.0
        %1947 = vmatprep.subr.mxu0 0.0
        %1948 = vmatpush1.msra.mxu0 0.0
        %1949 = vmatprep.subr.mxu0 0.0
        %1950 = vmatpush1.msra.mxu0 0.0
        %1951 = vmatprep.subr.mxu0 0.0
        %1952 = vmatpush1.msra.mxu0 0.0
        %1953 = vmatprep.subr.mxu0 0.0
        %1954 = vmatpush1.msra.mxu0 0.0
        %1955 = vmatprep.subr.mxu0 0.0
        %1956 = vmatpush1.msra.mxu0 0.0
        %1957 = vmatprep.subr.mxu0 0.0
        %1958 = vmatpush1.msra.mxu0 0.0
        %1959 = vmatprep.subr.mxu0 0.0
        %1960 = vmatpush1.msra.mxu0 0.0
        %1961 = vmatprep.subr.mxu0 0.0
        %1962 = vmatpush1.msra.mxu0 0.0
        %1963 = vmatprep.subr.mxu0 0.0
        %1964 = vmatpush1.msra.mxu0 0.0
        %1965 = vmatprep.subr.mxu0 0.0
        %1966 = vmatpush1.msra.mxu0 0.0
        %1967 = vmatprep.subr.mxu0 0.0
        %1968 = vmatpush1.msra.mxu0 0.0
        %1969 = vmatprep.subr.mxu0 0.0
        %1970 = vmatpush1.msra.mxu0 0.0
        %1971 = vmatprep.subr.mxu0 0.0
        %1972 = vmatpush1.msra.mxu0 0.0
        %1973 = vmatprep.subr.mxu0 0.0
        %1974 = vmatpush1.msra.mxu0 0.0
        %1975 = vmatprep.subr.mxu0 0.0
        %1976 = vmatpush1.msra.mxu0 0.0
        %1977 = vmatprep.subr.mxu0 0.0
        %1978 = vmatpush1.msra.mxu0 0.0
        %1979 = vmatprep.subr.mxu0 0.0
        %1980 = vmatpush1.msra.mxu0 0.0
        %1981 = vmatprep.subr.mxu0 0.0
        %1982 = vmatpush1.msra.mxu0 0.0
        %1983 = vmatprep.subr.mxu0 0.0
        %1984 = vmatpush1.msra.mxu0 0.0
        %1985 = vmatprep.subr.mxu0 0.0
        %1986 = vmatpush1.msra.mxu0 0.0
        %1987 = vmatprep.subr.mxu0 0.0
        %1988 = vmatpush1.msra.mxu0 0.0
        %1989 = vmatprep.subr.mxu0 0.0
        %1990 = vmatpush1.msra.mxu0 0.0
        %1991 = vmatprep.subr.mxu0 0.0
        %1992 = vmatpush1.msra.mxu0 0.0
        %1993 = vmatprep.mubr.f32.mxu0 0.0
        %1994 = vmatmul.mubr.f32.gmra.mrb[0].mxu0 %v1927
        %v1995 = vpop.f32.mrb[0].mxu0
        %v1996 = vadd.f32 0.0, %v1995
        %v1997 = vpop.f32.mrb[0].mxu0
        %1998 = vdwg.mxu0
        %v2000 = vsel %vm1445, %v1826, 0
        %2002 = vmatprep.subr.mxu0 0.0
        %2003 = vmatpush1.msra.mxu0 %v1443
        %2004 = vmatprep.subr.mxu0 0.0
        %2005 = vmatpush1.msra.mxu0 0.0
        %2006 = vmatprep.subr.mxu0 0.0
        %2007 = vmatpush1.msra.mxu0 0.0
        %2008 = vmatprep.subr.mxu0 0.0
        %2009 = vmatpush1.msra.mxu0 0.0
        %2010 = vmatprep.subr.mxu0 0.0
        %2011 = vmatpush1.msra.mxu0 0.0
        %2012 = vmatprep.subr.mxu0 0.0
        %2013 = vmatpush1.msra.mxu0 0.0
        %2014 = vmatprep.subr.mxu0 0.0
        %2015 = vmatpush1.msra.mxu0 0.0
        %2016 = vmatprep.subr.mxu0 0.0
        %2017 = vmatpush1.msra.mxu0 0.0
        %2018 = vmatprep.subr.mxu0 0.0
        %2019 = vmatpush1.msra.mxu0 0.0
        %2020 = vmatprep.subr.mxu0 0.0
        %2021 = vmatpush1.msra.mxu0 0.0
        %2022 = vmatprep.subr.mxu0 0.0
        %2023 = vmatpush1.msra.mxu0 0.0
        %2024 = vmatprep.subr.mxu0 0.0
        %2025 = vmatpush1.msra.mxu0 0.0
        %2026 = vmatprep.subr.mxu0 0.0
        %2027 = vmatpush1.msra.mxu0 0.0
        %2028 = vmatprep.subr.mxu0 0.0
        %2029 = vmatpush1.msra.mxu0 0.0
        %2030 = vmatprep.subr.mxu0 0.0
        %2031 = vmatpush1.msra.mxu0 0.0
        %2032 = vmatprep.subr.mxu0 0.0
        %2033 = vmatpush1.msra.mxu0 0.0
        %2034 = vmatprep.subr.mxu0 0.0
        %2035 = vmatpush1.msra.mxu0 0.0
        %2036 = vmatprep.subr.mxu0 0.0
        %2037 = vmatpush1.msra.mxu0 0.0
        %2038 = vmatprep.subr.mxu0 0.0
        %2039 = vmatpush1.msra.mxu0 0.0
        %2040 = vmatprep.subr.mxu0 0.0
        %2041 = vmatpush1.msra.mxu0 0.0
        %2042 = vmatprep.subr.mxu0 0.0
        %2043 = vmatpush1.msra.mxu0 0.0
        %2044 = vmatprep.subr.mxu0 0.0
        %2045 = vmatpush1.msra.mxu0 0.0
        %2046 = vmatprep.subr.mxu0 0.0
        %2047 = vmatpush1.msra.mxu0 0.0
        %2048 = vmatprep.subr.mxu0 0.0
        %2049 = vmatpush1.msra.mxu0 0.0
        %2050 = vmatprep.subr.mxu0 0.0
        %2051 = vmatpush1.msra.mxu0 0.0
        %2052 = vmatprep.subr.mxu0 0.0
        %2053 = vmatpush1.msra.mxu0 0.0
        %2054 = vmatprep.subr.mxu0 0.0
        %2055 = vmatpush1.msra.mxu0 0.0
        %2056 = vmatprep.subr.mxu0 0.0
        %2057 = vmatpush1.msra.mxu0 0.0
        %2058 = vmatprep.subr.mxu0 0.0
        %2059 = vmatpush1.msra.mxu0 0.0
        %2060 = vmatprep.subr.mxu0 0.0
        %2061 = vmatpush1.msra.mxu0 0.0
        %2062 = vmatprep.subr.mxu0 0.0
        %2063 = vmatpush1.msra.mxu0 0.0
        %2064 = vmatprep.subr.mxu0 0.0
        %2065 = vmatpush1.msra.mxu0 0.0
        %2066 = vmatprep.mubr.f32.mxu0 0.0
        %2067 = vmatmul.mubr.f32.gmra.mrb[0].mxu0 %v2000
        %v2068 = vpop.f32.mrb[0].mxu0
        %v2069 = vadd.f32 0.0, %v2068
        %v2070 = vpop.f32.mrb[0].mxu0
        %2071 = vdwg.mxu0
        %v2073 = vsel %vm1445, %v1828, 0
        %2075 = vmatprep.subr.mxu0 0.0
        %2076 = vmatpush1.msra.mxu0 %v1444
        %2077 = vmatprep.subr.mxu0 0.0
        %2078 = vmatpush1.msra.mxu0 0.0
        %2079 = vmatprep.subr.mxu0 0.0
        %2080 = vmatpush1.msra.mxu0 0.0
        %2081 = vmatprep.subr.mxu0 0.0
        %2082 = vmatpush1.msra.mxu0 0.0
        %2083 = vmatprep.subr.mxu0 0.0
        %2084 = vmatpush1.msra.mxu0 0.0
        %2085 = vmatprep.subr.mxu0 0.0
        %2086 = vmatpush1.msra.mxu0 0.0
        %2087 = vmatprep.subr.mxu0 0.0
        %2088 = vmatpush1.msra.mxu0 0.0
        %2089 = vmatprep.subr.mxu0 0.0
        %2090 = vmatpush1.msra.mxu0 0.0
        %2091 = vmatprep.subr.mxu0 0.0
        %2092 = vmatpush1.msra.mxu0 0.0
        %2093 = vmatprep.subr.mxu0 0.0
        %2094 = vmatpush1.msra.mxu0 0.0
        %2095 = vmatprep.subr.mxu0 0.0
        %2096 = vmatpush1.msra.mxu0 0.0
        %2097 = vmatprep.subr.mxu0 0.0
        %2098 = vmatpush1.msra.mxu0 0.0
        %2099 = vmatprep.subr.mxu0 0.0
        %2100 = vmatpush1.msra.mxu0 0.0
        %2101 = vmatprep.subr.mxu0 0.0
        %2102 = vmatpush1.msra.mxu0 0.0
        %2103 = vmatprep.subr.mxu0 0.0
        %2104 = vmatpush1.msra.mxu0 0.0
        %2105 = vmatprep.subr.mxu0 0.0
        %2106 = vmatpush1.msra.mxu0 0.0
        %2107 = vmatprep.subr.mxu0 0.0
        %2108 = vmatpush1.msra.mxu0 0.0
        %2109 = vmatprep.subr.mxu0 0.0
        %2110 = vmatpush1.msra.mxu0 0.0
        %2111 = vmatprep.subr.mxu0 0.0
        %2112 = vmatpush1.msra.mxu0 0.0
        %2113 = vmatprep.subr.mxu0 0.0
        %2114 = vmatpush1.msra.mxu0 0.0
        %2115 = vmatprep.subr.mxu0 0.0
        %2116 = vmatpush1.msra.mxu0 0.0
        %2117 = vmatprep.subr.mxu0 0.0
        %2118 = vmatpush1.msra.mxu0 0.0
        %2119 = vmatprep.subr.mxu0 0.0
        %2120 = vmatpush1.msra.mxu0 0.0
        %2121 = vmatprep.subr.mxu0 0.0
        %2122 = vmatpush1.msra.mxu0 0.0
        %2123 = vmatprep.subr.mxu0 0.0
        %2124 = vmatpush1.msra.mxu0 0.0
        %2125 = vmatprep.subr.mxu0 0.0
        %2126 = vmatpush1.msra.mxu0 0.0
        %2127 = vmatprep.subr.mxu0 0.0
        %2128 = vmatpush1.msra.mxu0 0.0
        %2129 = vmatprep.subr.mxu0 0.0
        %2130 = vmatpush1.msra.mxu0 0.0
        %2131 = vmatprep.subr.mxu0 0.0
        %2132 = vmatpush1.msra.mxu0 0.0
        %2133 = vmatprep.subr.mxu0 0.0
        %2134 = vmatpush1.msra.mxu0 0.0
        %2135 = vmatprep.subr.mxu0 0.0
        %2136 = vmatpush1.msra.mxu0 0.0
        %2137 = vmatprep.subr.mxu0 0.0
        %2138 = vmatpush1.msra.mxu0 0.0
        %2139 = vmatprep.mubr.f32.mxu0 0.0
        %2140 = vmatmul.mubr.f32.gmra.mrb[0].mxu0 %v2073
        %v2141 = vpop.f32.mrb[0].mxu0
        %v2142 = vadd.f32 0.0, %v2141
        %v2143 = vpop.f32.mrb[0].mxu0
        %2144 = vdwg.mxu0
        %v2145 = vld [vmem:[#allocation7] sm:$0xff]
        %v2146 = vld [vmem:[#allocation7 + $0x8] sm:$0xff]
        %v2147 = vld [vmem:[#allocation7 + $0x10] sm:$0xff]
        %v2148 = vld [vmem:[#allocation7 + $0x18] sm:$0xff]
        %2150 = vset.pattern.permute.xlu0 0
        %2151 = vperm.xlu0 %2150, %v1790
        %v2152 = vpop.permute.xlu0 %2151
        %2155 = vset.pattern.permute.xlu0 0
        %2156 = vperm.xlu0 %2155, %v1792
        %v2157 = vpop.permute.xlu0 %2156
        %2160 = vset.pattern.permute.xlu0 0
        %2161 = vperm.xlu0 %2160, %v1794
        %v2162 = vpop.permute.xlu0 %2161
        %2165 = vset.pattern.permute.xlu0 0
        %2166 = vperm.xlu0 %2165, %v1796
        %v2167 = vpop.permute.xlu0 %2166
        %v2169 = vmul.f32 %v2152, %v2145
        %v2170 = vmul.f32 %v2157, %v2146
        %v2171 = vmul.f32 %v2162, %v2147
        %v2172 = vmul.f32 %v2167, %v2148
        %v2173 = vadd.f32 %v2169, %v1923
        %v2174 = vadd.f32 %v2170, %v1996
        %v2175 = vadd.f32 %v2171, %v2069
        %v2176 = vadd.f32 %v2172, %v2142
        %2177 = vst.msk [vmem:[#allocation7] sm:$0xff] %vm1445, %v2173
        %2178 = vst.msk [vmem:[#allocation7 + $0x8] sm:$0xff] %vm1445, %v2174
        %2179 = vst.msk [vmem:[#allocation7 + $0x10] sm:$0xff] %vm1445, %v2175
        %2180 = vst.msk [vmem:[#allocation7 + $0x18] sm:$0xff] %vm1445, %v2176
        %vm2181 = vcmask 7168
        %2182 = vst.msk [vmem:[#allocation5] sm:$0xff] %vm2181, %v1781
        %2183 = vst.msk [vmem:[#allocation5 + $0x8] sm:$0xff] %vm2181, %v1782
        %2184 = vst.msk [vmem:[#allocation5 + $0x10] sm:$0xff] %vm2181, %v1783
        %2185 = vst.msk [vmem:[#allocation5 + $0x18] sm:$0xff] %vm2181, %v1784
        %2186 = vst.msk [vmem:[#allocation6] sm:$0xff] %vm2181, %v1849
        %2187 = vst.msk [vmem:[#allocation6 + $0x8] sm:$0xff] %vm2181, %v1850
        %2188 = vst.msk [vmem:[#allocation6 + $0x10] sm:$0xff] %vm2181, %v1851
        %2189 = vst.msk [vmem:[#allocation6 + $0x18] sm:$0xff] %vm2181, %v1852
        %p2190 = scmp.eq.s32.totalorder %s46, 1
        // Predicated region
        $region125: #{tpu_custom_call.1} parent=67 // pred_check
          %p2191 = pneg %p2190
        $region126: #{tpu_custom_call.1} parent=67 // pred_check_branch
          %2193 = sbr.rel (%p2191) target = $region128
        $region127: #{tpu_custom_call.1} parent=67 // pred_region
          %v2194 = vld [vmem:[#allocation7] sm:$0xff]
          %v2195 = vld [vmem:[#allocation7 + $0x8] sm:$0xff]
          %v2196 = vld [vmem:[#allocation7 + $0x10] sm:$0xff]
          %v2197 = vld [vmem:[#allocation7 + $0x18] sm:$0xff]
          %v2198 = vld [vmem:[#allocation6] sm:$0xff]
          %v2199 = vld [vmem:[#allocation6 + $0x8] sm:$0xff]
          %v2200 = vld [vmem:[#allocation6 + $0x10] sm:$0xff]
          %v2201 = vld [vmem:[#allocation6 + $0x18] sm:$0xff]
          %v2202 = vrcp.pop %v2198
          %v2203 = vrcp.pop %v2199
          %v2204 = vrcp.pop %v2200
          %v2205 = vrcp.pop %v2201
          %2207 = vset.pattern.permute.xlu0 0
          %2208 = vperm.xlu0 %2207, %v2202
          %v2209 = vpop.permute.xlu0 %2208
          %2212 = vset.pattern.permute.xlu0 0
          %2213 = vperm.xlu0 %2212, %v2203
          %v2214 = vpop.permute.xlu0 %2213
          %2217 = vset.pattern.permute.xlu0 0
          %2218 = vperm.xlu0 %2217, %v2204
          %v2219 = vpop.permute.xlu0 %2218
          %2222 = vset.pattern.permute.xlu0 0
          %2223 = vperm.xlu0 %2222, %v2205
          %v2224 = vpop.permute.xlu0 %2223
          %v2226 = vmul.f32 %v2194, %v2209
          %v2227 = vmul.f32 %v2195, %v2214
          %v2228 = vmul.f32 %v2196, %v2219
          %v2229 = vmul.f32 %v2197, %v2224
          %v2230 = vcombine.low %v2226, %v2228
          %v2231 = vcombine.high %v2226, %v2228
          %v2233 = vunpack.c.l.s4 1983009808
          %v2234 = vunpack.c.0.s8 %v2233
          %v2235 = vlaneseq
          %v2236 = vshrl.u32 %v2235, 7
          %v2237 = vsub.s32 %v2234, %v2236
          %v2238 = vrot.slane %v2230, %v2237
          %v2240 = vunpack.c.l.s4 1983009808
          %v2241 = vunpack.c.0.s8 %v2240
          %v2242 = vlaneseq
          %v2243 = vshrl.u32 %v2242, 7
          %v2244 = vsub.s32 %v2241, %v2243
          %v2245 = vrot.slane %v2231, %v2244
          %v2246 = vcombine.low %v2227, %v2229
          %v2247 = vcombine.high %v2227, %v2229
          %v2249 = vunpack.c.l.s4 1983009808
          %v2250 = vunpack.c.0.s8 %v2249
          %v2251 = vlaneseq
          %v2252 = vshrl.u32 %v2251, 7
          %v2253 = vsub.s32 %v2250, %v2252
          %v2254 = vrot.slane %v2246, %v2253
          %v2256 = vunpack.c.l.s4 1983009808
          %v2257 = vunpack.c.0.s8 %v2256
          %v2258 = vlaneseq
          %v2259 = vshrl.u32 %v2258, 7
          %v2260 = vsub.s32 %v2257, %v2259
          %v2261 = vrot.slane %v2247, %v2260
          %v2262 = vcombine.low %v2238, %v2254
          %v2263 = vcombine.high %v2238, %v2254
          %v2265 = vunpack.c.l.s4 1934713408
          %v2266 = vunpack.c.0.s8 %v2265
          %v2267 = vlaneseq
          %v2268 = vshrl.u32 %v2267, 7
          %v2269 = vsub.s32 %v2266, %v2268
          %v2270 = vrot.slane %v2262, %v2269
          %v2272 = vunpack.c.l.s4 1934713408
          %v2273 = vunpack.c.0.s8 %v2272
          %v2274 = vlaneseq
          %v2275 = vshrl.u32 %v2274, 7
          %v2276 = vsub.s32 %v2273, %v2275
          %v2277 = vrot.slane %v2263, %v2276
          %v2278 = vcombine.low %v2245, %v2261
          %v2279 = vcombine.high %v2245, %v2261
          %v2281 = vunpack.c.l.s4 1934713408
          %v2282 = vunpack.c.0.s8 %v2281
          %v2283 = vlaneseq
          %v2284 = vshrl.u32 %v2283, 7
          %v2285 = vsub.s32 %v2282, %v2284
          %v2286 = vrot.slane %v2278, %v2285
          %v2288 = vunpack.c.l.s4 1934713408
          %v2289 = vunpack.c.0.s8 %v2288
          %v2290 = vlaneseq
          %v2291 = vshrl.u32 %v2290, 7
          %v2292 = vsub.s32 %v2289, %v2291
          %v2293 = vrot.slane %v2279, %v2292
          %v2294 = vcombine.high %v2270, 0.0
          %v2295 = vcombine.high %v2277, 0.0
          %v2296 = vcombine.high %v2286, 0.0
          %v2297 = vcombine.high %v2293, 0.0
          %v2298 = vcombine.low %v2270, %v2277
          %v2300 = vunpack.c.l.s4 1983009808
          %v2301 = vunpack.c.0.s8 %v2300
          %v2302 = vlaneseq
          %v2303 = vshrl.u32 %v2302, 7
          %v2304 = vsub.s32 %v2301, %v2303
          %v2305 = vrot.slane %v2298, %v2304
          %v2306 = vcombine.low %v2294, %v2295
          %v2308 = vunpack.c.l.s4 1983009808
          %v2309 = vunpack.c.0.s8 %v2308
          %v2310 = vlaneseq
          %v2311 = vshrl.u32 %v2310, 7
          %v2312 = vsub.s32 %v2309, %v2311
          %v2313 = vrot.slane %v2306, %v2312
          %v2314 = vcombine.low %v2286, %v2293
          %v2316 = vunpack.c.l.s4 1983009808
          %v2317 = vunpack.c.0.s8 %v2316
          %v2318 = vlaneseq
          %v2319 = vshrl.u32 %v2318, 7
          %v2320 = vsub.s32 %v2317, %v2319
          %v2321 = vrot.slane %v2314, %v2320
          %v2322 = vcombine.low %v2296, %v2297
          %v2324 = vunpack.c.l.s4 1983009808
          %v2325 = vunpack.c.0.s8 %v2324
          %v2326 = vlaneseq
          %v2327 = vshrl.u32 %v2326, 7
          %v2328 = vsub.s32 %v2325, %v2327
          %v2329 = vrot.slane %v2322, %v2328
          %v2330 = vcombine.low %v2305, %v2313
          %v2331 = vcombine.high %v2305, %v2313
          %v2333 = vunpack.c.l.s4 1934713408
          %v2334 = vunpack.c.0.s8 %v2333
          %v2335 = vlaneseq
          %v2336 = vshrl.u32 %v2335, 7
          %v2337 = vsub.s32 %v2334, %v2336
          %v2338 = vrot.slane %v2330, %v2337
          %v2340 = vunpack.c.l.s4 1934713408
          %v2341 = vunpack.c.0.s8 %v2340
          %v2342 = vlaneseq
          %v2343 = vshrl.u32 %v2342, 7
          %v2344 = vsub.s32 %v2341, %v2343
          %v2345 = vrot.slane %v2331, %v2344
          %v2346 = vcombine.low %v2321, %v2329
          %v2347 = vcombine.high %v2321, %v2329
          %v2349 = vunpack.c.l.s4 1934713408
          %v2350 = vunpack.c.0.s8 %v2349
          %v2351 = vlaneseq
          %v2352 = vshrl.u32 %v2351, 7
          %v2353 = vsub.s32 %v2350, %v2352
          %v2354 = vrot.slane %v2346, %v2353
          %v2356 = vunpack.c.l.s4 1934713408
          %v2357 = vunpack.c.0.s8 %v2356
          %v2358 = vlaneseq
          %v2359 = vshrl.u32 %v2358, 7
          %v2360 = vsub.s32 %v2357, %v2359
          %v2361 = vrot.slane %v2347, %v2360
          %v2362 = vcombine.low %v2338, %v2354
          %v2363 = vcombine.high %v2338, %v2354
          %v2364 = vcombine.low %v2345, %v2361
          %v2365 = vcombine.high %v2345, %v2361
          %2367 = vrot.lane.b32.xlu0 %v2363, 8
          %v2368 = vpop.permute.xlu0 %2367
          %2371 = vrot.lane.b32.xlu0 %v2364, 16
          %v2372 = vpop.permute.xlu0 %2371
          %2375 = vrot.lane.b32.xlu0 %v2365, 24
          %v2376 = vpop.permute.xlu0 %2375
          %v2378 = vsel %vm1445, %v2362, %v2368
          %vm2379 = vcmask 130048
          %v2380 = vsel %vm2379, %v2378, %v2372
          %vm2381 = vcmask 195584
          %v2382 = vsel %vm2381, %v2380, %v2376
          %v2383 = vld [vmem:[#allocation25] sm:$0xff]
          %v2384 = vld [vmem:[#allocation25 + $0x8] sm:$0xff]
          %v2385 = vld [vmem:[#allocation25 + $0x10] sm:$0xff]
          %v2386 = vld [vmem:[#allocation25 + $0x18] sm:$0xff]
          %v2387 = vld [vmem:[#allocation26] sm:$0x1]
          %v2389 = vlaneseq
          %v2390 = vshrl.u32 %v2389, 7
          %v2391 = vsub.s32 0, %v2390
          %v2392 = vrot.slane %v2387, %v2391
          %vm2394 = vcmask 261120
          %v2396 = vsel %vm2394, %v2382, 0
          %2398 = vmatprep.subr.mxu0 0.0
          %2399 = vmatpush1.msra.mxu0 %v2383
          %2400 = vmatprep.subr.mxu0 0.0
          %2401 = vmatpush1.msra.mxu0 %v2384
          %2402 = vmatprep.subr.mxu0 0.0
          %2403 = vmatpush1.msra.mxu0 %v2385
          %2404 = vmatprep.subr.mxu0 0.0
          %2405 = vmatpush1.msra.mxu0 %v2386
          %2406 = vmatprep.subr.mxu0 0.0
          %2407 = vmatpush1.msra.mxu0 0.0
          %2408 = vmatprep.subr.mxu0 0.0
          %2409 = vmatpush1.msra.mxu0 0.0
          %2410 = vmatprep.subr.mxu0 0.0
          %2411 = vmatpush1.msra.mxu0 0.0
          %2412 = vmatprep.subr.mxu0 0.0
          %2413 = vmatpush1.msra.mxu0 0.0
          %2414 = vmatprep.subr.mxu0 0.0
          %2415 = vmatpush1.msra.mxu0 0.0
          %2416 = vmatprep.subr.mxu0 0.0
          %2417 = vmatpush1.msra.mxu0 0.0
          %2418 = vmatprep.subr.mxu0 0.0
          %2419 = vmatpush1.msra.mxu0 0.0
          %2420 = vmatprep.subr.mxu0 0.0
          %2421 = vmatpush1.msra.mxu0 0.0
          %2422 = vmatprep.subr.mxu0 0.0
          %2423 = vmatpush1.msra.mxu0 0.0
          %2424 = vmatprep.subr.mxu0 0.0
          %2425 = vmatpush1.msra.mxu0 0.0
          %2426 = vmatprep.subr.mxu0 0.0
          %2427 = vmatpush1.msra.mxu0 0.0
          %2428 = vmatprep.subr.mxu0 0.0
          %2429 = vmatpush1.msra.mxu0 0.0
          %2430 = vmatprep.subr.mxu0 0.0
          %2431 = vmatpush1.msra.mxu0 0.0
          %2432 = vmatprep.subr.mxu0 0.0
          %2433 = vmatpush1.msra.mxu0 0.0
          %2434 = vmatprep.subr.mxu0 0.0
          %2435 = vmatpush1.msra.mxu0 0.0
          %2436 = vmatprep.subr.mxu0 0.0
          %2437 = vmatpush1.msra.mxu0 0.0
          %2438 = vmatprep.subr.mxu0 0.0
          %2439 = vmatpush1.msra.mxu0 0.0
          %2440 = vmatprep.subr.mxu0 0.0
          %2441 = vmatpush1.msra.mxu0 0.0
          %2442 = vmatprep.subr.mxu0 0.0
          %2443 = vmatpush1.msra.mxu0 0.0
          %2444 = vmatprep.subr.mxu0 0.0
          %2445 = vmatpush1.msra.mxu0 0.0
          %2446 = vmatprep.subr.mxu0 0.0
          %2447 = vmatpush1.msra.mxu0 0.0
          %2448 = vmatprep.subr.mxu0 0.0
          %2449 = vmatpush1.msra.mxu0 0.0
          %2450 = vmatprep.subr.mxu0 0.0
          %2451 = vmatpush1.msra.mxu0 0.0
          %2452 = vmatprep.subr.mxu0 0.0
          %2453 = vmatpush1.msra.mxu0 0.0
          %2454 = vmatprep.subr.mxu0 0.0
          %2455 = vmatpush1.msra.mxu0 0.0
          %2456 = vmatprep.subr.mxu0 0.0
          %2457 = vmatpush1.msra.mxu0 0.0
          %2458 = vmatprep.subr.mxu0 0.0
          %2459 = vmatpush1.msra.mxu0 0.0
          %2460 = vmatprep.subr.mxu0 0.0
          %2461 = vmatpush1.msra.mxu0 0.0
          %2462 = vmatprep.mubr.f32.mxu0 0.0
          %2463 = vmatmul.mubr.f32.gmra.mrb[0].mxu0 %v2396
          %v2464 = vpop.f32.mrb[0].mxu0
          %v2465 = vadd.f32 %v2392, %v2464
          %v2466 = vpop.f32.mrb[0].mxu0
          %2467 = vdwg.mxu0
          %2468 = vst.msk [vmem:[%s690] sm:$0xff] %vm2394, %v2465
        $region128: #{tpu_custom_call.1} parent=67 // pred_fallthru
          _
        %s2469 = sand.u32 %s356, 1
        %s2470 = scalar_lea.sflag [#allocation10], %s2469
        %s2471 = sand.u32 %s356, 1
        %s2472 = smul.addr %s2471, 8
        %s2473 = scalar_lea.vmem [#allocation28], %s2472
        // Predicated region
        $region129: #{tpu_custom_call.1} parent=67 // pred_check
          %p2474 = pneg %p366
        $region130: #{tpu_custom_call.1} parent=67 // pred_check_branch
          %2476 = sbr.rel (%p2474) target = $region132
        $region131: #{tpu_custom_call.1} parent=67 // pred_region
          %s2478 = ssub.s32 128, 128
          %2479 = vsyncadd %s2470, %s2478
          %s2480 = smul.addr %s44, 2
          %s2481 = sadd.s32 %s45, %s2480
          %s2482 = smul.addr %s2481, 128
          %s2483 = scalar_lea.hbm %s12, %s2482
          %s2485 = sshll.u32 %s2473, 4
          %s2486 = int_to_ptr.vmem [resolvable:$true] %s2485
          %2488 = dma.vmem_to_hbm [thread:$0]  %s2486, 128, %s2483, %s2470
        $region132: #{tpu_custom_call.1} parent=67 // pred_fallthru
          _
      $region68: #{tpu_custom_call.1} parent=5 // pred_fallthru
        _
      %p2489 = scmp.le.s32.totalorder 2, %s34
      // Predicated region
      $region133: #{tpu_custom_call.1} parent=5 // pred_check
        %p2490 = pneg %p2489
      $region134: #{tpu_custom_call.1} parent=5 // pred_check_branch
        %2492 = sbr.rel (%p2490) target = $region136
      $region135: #{tpu_custom_call.1} parent=5 // pred_region
        %s2493 = ssub.s32 %s34, 2
        // Predicated region
        $region137: #{tpu_custom_call.1} parent=135 // pred_check
          %p2494 = pneg %p372
        $region138: #{tpu_custom_call.1} parent=135 // pred_check_branch
          %2496 = sbr.rel (%p2494) target = $region140
        $region139: #{tpu_custom_call.1} parent=135 // pred_region
          %s2497 = sand.u32 %s357, 1
          %s2498 = scalar_lea.sflag [#allocation10], %s2497
          %s2499 = sand.u32 %s357, 1
          %s2500 = smul.addr %s2499, 8
          %s2501 = scalar_lea.vmem [#allocation28], %s2500
          %2502 = dma.done %s2498, 128
        $region140: #{tpu_custom_call.1} parent=135 // pred_fallthru
          _
      $region136: #{tpu_custom_call.1} parent=5 // pred_fallthru
        _
    $region6: #{tpu_custom_call.1} parent=1 // loop_footer
      %s38 = sadd.s32 1, %s34
    $region7: #{tpu_custom_call.1} parent=1 // loop_footer_branch
      %33 = sbr.rel target = $region3
    $region8: #{tpu_custom_call.1} parent=1 // loop_exit
      _
    %2503 = vsyncpa [#allocation9], 1
    %s2504 = scalar_lea.sflag [#allocation9], 1
    %2505 = vsyncpa %s2504, 1
    %2506 = vsyncpa [#allocation12], 1
    %s2507 = scalar_lea.sflag [#allocation12], 1
    %2508 = vsyncpa %s2507, 1
    %2509 = vsyncpa [#allocation15], 1
    %s2510 = scalar_lea.sflag [#allocation15], 1
    %2511 = vsyncpa %s2510, 1
    %2512 = vsyncpa [#allocation18], 1
    %2513 = vsyncpa [#allocation21], 1
    %2514 = vsyncpa [#allocation24], 1
    %2515 = vsyncpa [#allocation27], 1
    %2516 = vsyncpa [#allocation10], 1
    %s2517 = scalar_lea.sflag [#allocation10], 1
    %2518 = vsyncpa %s2517, 1

</llo_original>
